<compile_context>
chip_gen: v5e
topology: v5e:2x2
jax: 0.10.0
libtpu: 0.0.40
codegen_flags: <defaults>
</compile_context>

<pallas_src>
import math

import jax
import jax.numpy as jnp
from jax import lax
from jax.experimental import pallas as pl
from jax.experimental.pallas import tpu as pltpu

LN_EPS = 1e-5
NEG_INF = -1e30


# --------------------------- fused transformer block ---------------------------

def _make_block_kernel(n_head):
    def kernel(x_ref, km_ref,
               ln1_g_ref, ln1_b_ref, attn_w_ref, attn_b_ref,
               proj_w_ref, proj_b_ref,
               ln2_g_ref, ln2_b_ref, fc_w_ref, fc_b_ref,
               mlp_w_ref, mlp_b_ref,
               o_ref):
        x = x_ref[0]                                  # (S, E) f32
        S, E = x.shape
        H = n_head
        dh = E // H

        # ---- LayerNorm 1 fused into the QKV matmul prologue ----
        mu = jnp.mean(x, axis=-1, keepdims=True)
        var = jnp.mean(jnp.square(x - mu), axis=-1, keepdims=True)
        h = (x - mu) * lax.rsqrt(var + LN_EPS) * ln1_g_ref[...] + ln1_b_ref[...]

        qkv = jnp.dot(h.astype(jnp.bfloat16), attn_w_ref[...],
                      preferred_element_type=jnp.float32) + attn_b_ref[...]  # (S, 3E)

        # ---- causal multi-head attention (heads packed, no transposes) ----
        km = km_ref[0]                                # (1, S) int32, 1 = attend
        row = lax.broadcasted_iota(jnp.int32, (S, S), 0)
        col = lax.broadcasted_iota(jnp.int32, (S, S), 1)
        keep = jnp.logical_and(col <= row, km != 0)   # (S, S)

        scale = 1.0 / math.sqrt(dh)
        att_out = jnp.zeros((S, E), jnp.float32)
        for hh in range(H):                           # static unroll over heads
            lo, hi = hh * dh, (hh + 1) * dh
            qh = qkv[:, lo:hi].astype(jnp.bfloat16)
            kh = qkv[:, E + lo:E + hi].astype(jnp.bfloat16)
            vh = qkv[:, 2 * E + lo:2 * E + hi].astype(jnp.bfloat16)
            att = lax.dot_general(qh, kh, (((1,), (1,)), ((), ())),
                                  preferred_element_type=jnp.float32) * scale
            att = jnp.where(keep, att, NEG_INF)
            att = att - jnp.max(att, axis=-1, keepdims=True)
            p = jnp.exp(att)
            p = jnp.where(keep, p, 0.0)               # robust re-zero after exp
            denom = jnp.maximum(jnp.sum(p, axis=-1, keepdims=True), 1e-30)
            p = p / denom
            yh = jnp.dot(p.astype(jnp.bfloat16), vh,
                         preferred_element_type=jnp.float32)          # (S, dh)
            # Fold the output projection per head: avoids concat/transpose and
            # keeps the accumulated result lane-packed at width E.
            att_out = att_out + jnp.dot(yh.astype(jnp.bfloat16),
                                        proj_w_ref[lo:hi, :],
                                        preferred_element_type=jnp.float32)
        x1 = x + att_out + proj_b_ref[...]

        # ---- LayerNorm 2 + MLP (GELU tanh) ----
        mu2 = jnp.mean(x1, axis=-1, keepdims=True)
        var2 = jnp.mean(jnp.square(x1 - mu2), axis=-1, keepdims=True)
        h2 = (x1 - mu2) * lax.rsqrt(var2 + LN_EPS) * ln2_g_ref[...] + ln2_b_ref[...]

        h2 = jnp.dot(h2.astype(jnp.bfloat16), fc_w_ref[...],
                     preferred_element_type=jnp.float32) + fc_b_ref[...]
        c = math.sqrt(2.0 / math.pi)
        h2 = 0.5 * h2 * (1.0 + jnp.tanh(c * (h2 + 0.044715 * h2 * h2 * h2)))
        h2 = jnp.dot(h2.astype(jnp.bfloat16), mlp_w_ref[...],
                     preferred_element_type=jnp.float32) + mlp_b_ref[...]

        o_ref[0] = x1 + h2
    return kernel


def block_forward(p, x, key_mask, n_head):
    """x: (B, S, E) f32; key_mask: (B, 1, S) int32."""
    B, S, E = x.shape
    args = (
        x, key_mask,
        p['ln1_g'].reshape(1, E), p['ln1_b'].reshape(1, E),
        p['attn_w'], p['attn_b'].reshape(1, 3 * E),
        p['proj_w'], p['proj_b'].reshape(1, E),
        p['ln2_g'].reshape(1, E), p['ln2_b'].reshape(1, E),
        p['fc_w'], p['fc_b'].reshape(1, 4 * E),
        p['mlp_proj_w'], p['mlp_proj_b'].reshape(1, E),
    )

    def full_spec(arr):
        return pl.BlockSpec(arr.shape, lambda b: (0,) * arr.ndim)

    in_specs = [
        pl.BlockSpec((1, S, E), lambda b: (b, 0, 0)),
        pl.BlockSpec((1, 1, S), lambda b: (b, 0, 0)),
    ] + [full_spec(a) for a in args[2:]]

    return pl.pallas_call(
        _make_block_kernel(n_head),
        out_shape=jax.ShapeDtypeStruct((B, S, E), jnp.float32),
        grid=(B,),
        in_specs=in_specs,
        out_specs=pl.BlockSpec((1, S, E), lambda b: (b, 0, 0)),
        compiler_params=pltpu.CompilerParams(
            dimension_semantics=("parallel",)),
    )(*args)


# ----------------- fused final LayerNorm + weight-tied lm_head -----------------

def _lnf_lm_head_kernel(x_ref, g_ref, b_ref, w_ref, o_ref):
    x = x_ref[...]                                    # (tm, E) f32
    mu = jnp.mean(x, axis=-1, keepdims=True)
    var = jnp.mean(jnp.square(x - mu), axis=-1, keepdims=True)
    h = (x - mu) * lax.rsqrt(var + LN_EPS) * g_ref[...] + b_ref[...]
    # Contract against the (V, E) embedding table directly (weight tying):
    # no transposed copy materialized, no zero bias added.
    o_ref[...] = lax.dot_general(
        h.astype(jnp.bfloat16), w_ref[...],
        dimension_numbers=(((1,), (1,)), ((), ())),
        preferred_element_type=jnp.float32)


def lnf_lm_head(x2d, gamma, beta, wte):
    M, E = x2d.shape
    V = wte.shape[0]
    tm = M if (M <= 128 or M % 128 != 0) else 128
    tv = next((t for t in (512, 256, 128) if V % t == 0), V)
    grid = (pl.cdiv(M, tm), pl.cdiv(V, tv))
    return pl.pallas_call(
        _lnf_lm_head_kernel,
        out_shape=jax.ShapeDtypeStruct((M, V), jnp.float32),
        grid=grid,
        in_specs=[
            pl.BlockSpec((tm, E), lambda m, v: (m, 0)),
            pl.BlockSpec((1, E), lambda m, v: (0, 0)),
            pl.BlockSpec((1, E), lambda m, v: (0, 0)),
            pl.BlockSpec((tv, E), lambda m, v: (v, 0)),   # weight streamed over V
        ],
        out_specs=pl.BlockSpec((tm, tv), lambda m, v: (m, v)),
        compiler_params=pltpu.CompilerParams(
            dimension_semantics=("parallel", "parallel")),
    )(x2d, gamma.reshape(1, E), beta.reshape(1, E), wte)


# --------------------------------- model glue ----------------------------------

def gpt_forward(params, cfg, idx, encoder_output, attn_mask=None):
    B, T = idx.shape
    E, H = cfg['n_embed'], cfg['n_head']
    assert T + 1 <= cfg['block_size'], "sequence (incl. CLS prefix) exceeds block_size"
    S = T + 1

    # Embedding gather + CLS prefix + positional add stay in plain JAX (glue).
    tok = jnp.take(params['wte'], idx, axis=0).astype(jnp.float32)        # (B, T, E)
    tok = jnp.concatenate(
        [encoder_output[:, None, :].astype(jnp.float32), tok], axis=1)    # (B, S, E)
    x = tok + params['wpe'][:S][None]                                     # drop = identity (eval)

    # Key mask (B, 1, S); CLS column always attendable; no per-head duplication.
    if attn_mask is not None:
        am = jnp.concatenate(
            [jnp.ones((B, 1), jnp.int32), attn_mask.astype(jnp.int32)], axis=1)
    else:
        am = jnp.ones((B, S), jnp.int32)
    key_mask = am[:, None, :]

    for p in params['blocks']:
        x = block_forward(p, x, key_mask, H)

    logits = lnf_lm_head(x.reshape(B * S, E),
                         params['ln_f_g'], params['ln_f_b'], params['wte'])
    return logits.reshape(B, S, -1)


def init_params(key, cfg):
    E, V, L, BS = cfg['n_embed'], cfg['vocab_size'], cfg['n_layer'], cfg['block_size']
    std = 0.02
    stdp = 0.02 * (2 * L) ** (-0.5)        # NANOGPT_SCALE_INIT for residual projections
    keys = iter(jax.random.split(key, 2 + 4 * L))

    def nrm(k, shape, s, dtype=jnp.bfloat16):
        return (s * jax.random.normal(k, shape, jnp.float32)).astype(dtype)

    params = {
        'wte': nrm(next(keys), (V, E), std),                 # bf16, tied with lm_head
        'wpe': nrm(next(keys), (BS, E), std, jnp.float32),
        'ln_f_g': jnp.ones((E,), jnp.float32),
        'ln_f_b': jnp.zeros((E,), jnp.float32),
        'blocks': [],
    }
    for _ in range(L):
        params['blocks'].append({
            'ln1_g': jnp.ones((E,), jnp.float32), 'ln1_b': jnp.zeros((E,), jnp.float32),
            'attn_w': nrm(next(keys), (E, 3 * E), std),
            'attn_b': jnp.zeros((3 * E,), jnp.float32),
            'proj_w': nrm(next(keys), (E, E), stdp),
            'proj_b': jnp.zeros((E,), jnp.float32),
            'ln2_g': jnp.ones((E,), jnp.float32), 'ln2_b': jnp.zeros((E,), jnp.float32),
            'fc_w': nrm(next(keys), (E, 4 * E), std),
            'fc_b': jnp.zeros((4 * E,), jnp.float32),
            'mlp_proj_w': nrm(next(keys), (4 * E, E), stdp),
            'mlp_proj_b': jnp.zeros((E,), jnp.float32),
        })
    return params


if __name__ == "__main__":
    cfg = dict(block_size=16, vocab_size=128, n_layer=2, n_head=4,
               n_embed=32, dropout=0.3)

    key = jax.random.PRNGKey(0)
    kp, ki, ke, _ = jax.random.split(key, 4)
    params = init_params(kp, cfg)

    B, T = 2, 7
    idx = jax.random.randint(ki, (B, T), 0, cfg['vocab_size'], dtype=jnp.int32)
    encoder_output = jax.random.normal(ke, (B, cfg['n_embed']), jnp.float32)
    # padding mask over the token sequence (1 = real token, 0 = pad)
    attn_mask = jnp.concatenate(
        [jnp.ones((B, 5), jnp.int32), jnp.zeros((B, T - 5), jnp.int32)], axis=1)

    logits = gpt_forward(params, cfg, idx, encoder_output, attn_mask)
    logits = jax.block_until_ready(logits)

    assert logits.shape == (B, T + 1, cfg['vocab_size']), logits.shape
    assert bool(jnp.all(jnp.isfinite(logits)))
    print("KERNEL_OK")
</pallas_src>

<mosaic_0001>
module attributes {stable_mosaic.version = 11 : i64} {
  func.func @kernel(%arg0: i32, %arg1: memref<1x8x32xf32, #tpu.memory_space<vmem>>, %arg2: memref<1x1x8xi32, #tpu.memory_space<vmem>>, %arg3: memref<1x32xf32, #tpu.memory_space<vmem>>, %arg4: memref<1x32xf32, #tpu.memory_space<vmem>>, %arg5: memref<32x96xbf16, #tpu.memory_space<vmem>>, %arg6: memref<1x96xf32, #tpu.memory_space<vmem>>, %arg7: memref<32x32xbf16, #tpu.memory_space<vmem>>, %arg8: memref<1x32xf32, #tpu.memory_space<vmem>>, %arg9: memref<1x32xf32, #tpu.memory_space<vmem>>, %arg10: memref<1x32xf32, #tpu.memory_space<vmem>>, %arg11: memref<32x128xbf16, #tpu.memory_space<vmem>>, %arg12: memref<1x128xf32, #tpu.memory_space<vmem>>, %arg13: memref<128x32xbf16, #tpu.memory_space<vmem>>, %arg14: memref<1x32xf32, #tpu.memory_space<vmem>>, %arg15: memref<1x8x32xf32, #tpu.memory_space<vmem>>) attributes {dimension_semantics = [#tpu.dimension_semantics<parallel>], iteration_bounds = array<i64: 2>, scalar_prefetch = 0 : i64, scratch_operands = 0 : i64, tpu.core_type = #tpu.core_type<tc>, window_params = [{transform_indices = @transform_0, window_bounds = array<i64: 1, 8, 32>}, {transform_indices = @transform_1, window_bounds = array<i64: 1, 1, 8>}, {pipeline_mode = #tpu.pipeline_mode<synchronous>, transform_indices = @transform_2, window_bounds = array<i64: 1, 32>}, {pipeline_mode = #tpu.pipeline_mode<synchronous>, transform_indices = @transform_3, window_bounds = array<i64: 1, 32>}, {pipeline_mode = #tpu.pipeline_mode<synchronous>, transform_indices = @transform_4, window_bounds = array<i64: 32, 96>}, {pipeline_mode = #tpu.pipeline_mode<synchronous>, transform_indices = @transform_5, window_bounds = array<i64: 1, 96>}, {pipeline_mode = #tpu.pipeline_mode<synchronous>, transform_indices = @transform_6, window_bounds = array<i64: 32, 32>}, {pipeline_mode = #tpu.pipeline_mode<synchronous>, transform_indices = @transform_7, window_bounds = array<i64: 1, 32>}, {pipeline_mode = #tpu.pipeline_mode<synchronous>, transform_indices = @transform_8, window_bounds = array<i64: 1, 32>}, {pipeline_mode = #tpu.pipeline_mode<synchronous>, transform_indices = @transform_9, window_bounds = array<i64: 1, 32>}, {pipeline_mode = #tpu.pipeline_mode<synchronous>, transform_indices = @transform_10, window_bounds = array<i64: 32, 128>}, {pipeline_mode = #tpu.pipeline_mode<synchronous>, transform_indices = @transform_11, window_bounds = array<i64: 1, 128>}, {pipeline_mode = #tpu.pipeline_mode<synchronous>, transform_indices = @transform_12, window_bounds = array<i64: 128, 32>}, {pipeline_mode = #tpu.pipeline_mode<synchronous>, transform_indices = @transform_13, window_bounds = array<i64: 1, 32>}, {transform_indices = @transform_14, window_bounds = array<i64: 1, 8, 32>}]} {
    %c0 = arith.constant 0 : index
    %c0_0 = arith.constant 0 : index
    %c0_1 = arith.constant 0 : index
    %0 = vector.load %arg1[%c0, %c0_0, %c0_1] : memref<1x8x32xf32, #tpu.memory_space<vmem>>, vector<1x8x32xf32>
    %1 = vector.shape_cast %0 : vector<1x8x32xf32> to vector<8x32xf32>
    %cst = arith.constant dense<0.000000e+00> : vector<8xf32>
    %2 = vector.multi_reduction <add>, %1, %cst [1] : vector<8x32xf32> to vector<8xf32>
    %3 = vector.shape_cast %2 : vector<8xf32> to vector<8x1xf32>
    %cst_2 = arith.constant 3.200000e+01 : f32
    %4 = vector.broadcast %cst_2 : f32 to vector<8x1xf32>
    %5 = arith.divf %3, %4 : vector<8x1xf32>
    %6 = vector.broadcast %5 : vector<8x1xf32> to vector<8x32xf32>
    %7 = arith.subf %1, %6 : vector<8x32xf32>
    %8 = arith.mulf %7, %7 : vector<8x32xf32>
    %cst_3 = arith.constant dense<0.000000e+00> : vector<8xf32>
    %9 = vector.multi_reduction <add>, %8, %cst_3 [1] : vector<8x32xf32> to vector<8xf32>
    %10 = vector.shape_cast %9 : vector<8xf32> to vector<8x1xf32>
    %cst_4 = arith.constant 3.200000e+01 : f32
    %11 = vector.broadcast %cst_4 : f32 to vector<8x1xf32>
    %12 = arith.divf %10, %11 : vector<8x1xf32>
    %13 = vector.broadcast %5 : vector<8x1xf32> to vector<8x32xf32>
    %14 = arith.subf %1, %13 : vector<8x32xf32>
    %cst_5 = arith.constant 9.99999974E-6 : f32
    %15 = vector.broadcast %cst_5 : f32 to vector<8x1xf32>
    %16 = arith.addf %12, %15 : vector<8x1xf32>
    %17 = math.rsqrt %16 : vector<8x1xf32>
    %18 = vector.broadcast %17 : vector<8x1xf32> to vector<8x32xf32>
    %19 = arith.mulf %14, %18 : vector<8x32xf32>
    %c0_6 = arith.constant 0 : index
    %c0_7 = arith.constant 0 : index
    %20 = vector.load %arg3[%c0_6, %c0_7] : memref<1x32xf32, #tpu.memory_space<vmem>>, vector<1x32xf32>
    %21 = vector.broadcast %20 : vector<1x32xf32> to vector<8x32xf32>
    %22 = arith.mulf %19, %21 : vector<8x32xf32>
    %c0_8 = arith.constant 0 : index
    %c0_9 = arith.constant 0 : index
    %23 = vector.load %arg4[%c0_8, %c0_9] : memref<1x32xf32, #tpu.memory_space<vmem>>, vector<1x32xf32>
    %24 = vector.broadcast %23 : vector<1x32xf32> to vector<8x32xf32>
    %25 = arith.addf %22, %24 : vector<8x32xf32>
    %26 = arith.truncf %25 : vector<8x32xf32> to vector<8x32xbf16>
    %c0_10 = arith.constant 0 : index
    %c0_11 = arith.constant 0 : index
    %27 = vector.load %arg5[%c0_10, %c0_11] : memref<32x96xbf16, #tpu.memory_space<vmem>>, vector<32x96xbf16>
    %cst_12 = arith.constant dense<0.000000e+00> : vector<8x96xf32>
    %28 = tpu.matmul %26, %27, %cst_12 {dimension_numbers = #tpu.dot_dimension_numbers<[1], [0], [0], [1], [0, 0, 1, 1], [], []>} : vector<8x32xbf16>, vector<32x96xbf16>, vector<8x96xf32> -> vector<8x96xf32>
    %c0_13 = arith.constant 0 : index
    %c0_14 = arith.constant 0 : index
    %29 = vector.load %arg6[%c0_13, %c0_14] : memref<1x96xf32, #tpu.memory_space<vmem>>, vector<1x96xf32>
    %30 = vector.broadcast %29 : vector<1x96xf32> to vector<8x96xf32>
    %31 = arith.addf %28, %30 : vector<8x96xf32>
    %c0_15 = arith.constant 0 : index
    %c0_16 = arith.constant 0 : index
    %c0_17 = arith.constant 0 : index
    %32 = vector.load %arg2[%c0_15, %c0_16, %c0_17] : memref<1x1x8xi32, #tpu.memory_space<vmem>>, vector<1x1x8xi32>
    %33 = vector.shape_cast %32 : vector<1x1x8xi32> to vector<1x8xi32>
    %34 = tpu.iota {dimensions = array<i32: 0>} : vector<8x8xi32>
    %35 = tpu.iota {dimensions = array<i32: 1>} : vector<8x8xi32>
    %36 = arith.cmpi sle, %35, %34 : vector<8x8xi32>
    %c0_i32 = arith.constant 0 : i32
    %37 = vector.broadcast %c0_i32 : i32 to vector<1x8xi32>
    %38 = arith.cmpi ne, %33, %37 : vector<1x8xi32>
    %39 = vector.broadcast %38 : vector<1x8xi1> to vector<8x8xi1>
    %40 = arith.andi %36, %39 : vector<8x8xi1>
    %cst_18 = arith.constant 0.000000e+00 : f32
    %41 = vector.broadcast %cst_18 : f32 to vector<8x32xf32>
    %42 = vector.extract_strided_slice %31 {offsets = [0, 0], sizes = [8, 8], strides = [1, 1]} : vector<8x96xf32> to vector<8x8xf32>
    %43 = arith.truncf %42 : vector<8x8xf32> to vector<8x8xbf16>
    %44 = vector.extract_strided_slice %31 {offsets = [0, 32], sizes = [8, 8], strides = [1, 1]} : vector<8x96xf32> to vector<8x8xf32>
    %45 = arith.truncf %44 : vector<8x8xf32> to vector<8x8xbf16>
    %46 = vector.extract_strided_slice %31 {offsets = [0, 64], sizes = [8, 8], strides = [1, 1]} : vector<8x96xf32> to vector<8x8xf32>
    %47 = arith.truncf %46 : vector<8x8xf32> to vector<8x8xbf16>
    %cst_19 = arith.constant dense<0.000000e+00> : vector<8x8xf32>
    %48 = tpu.matmul %43, %45, %cst_19 {dimension_numbers = #tpu.dot_dimension_numbers<[1], [1], [0], [0], [0, 0, 1, 0], [], []>} : vector<8x8xbf16>, vector<8x8xbf16>, vector<8x8xf32> -> vector<8x8xf32>
    %cst_20 = arith.constant 0.353553385 : f32
    %49 = vector.broadcast %cst_20 : f32 to vector<8x8xf32>
    %50 = arith.mulf %48, %49 : vector<8x8xf32>
    %cst_21 = arith.constant -1.000000e+30 : f32
    %51 = vector.broadcast %cst_21 : f32 to vector<8x8xf32>
    %52 = arith.select %40, %50, %51 : vector<8x8xi1>, vector<8x8xf32>
    %cst_22 = arith.constant dense<0xFF800000> : vector<8xf32>
    %53 = vector.multi_reduction <maximumf>, %52, %cst_22 [1] : vector<8x8xf32> to vector<8xf32>
    %54 = vector.shape_cast %53 : vector<8xf32> to vector<8x1xf32>
    %55 = vector.broadcast %54 : vector<8x1xf32> to vector<8x8xf32>
    %56 = arith.subf %52, %55 : vector<8x8xf32>
    %57 = math.exp %56 : vector<8x8xf32>
    %cst_23 = arith.constant 0.000000e+00 : f32
    %58 = vector.broadcast %cst_23 : f32 to vector<8x8xf32>
    %59 = arith.select %40, %57, %58 : vector<8x8xi1>, vector<8x8xf32>
    %cst_24 = arith.constant dense<0.000000e+00> : vector<8xf32>
    %60 = vector.multi_reduction <add>, %59, %cst_24 [1] : vector<8x8xf32> to vector<8xf32>
    %61 = vector.shape_cast %60 : vector<8xf32> to vector<8x1xf32>
    %cst_25 = arith.constant 1.000000e-30 : f32
    %62 = vector.broadcast %cst_25 : f32 to vector<8x1xf32>
    %63 = arith.maximumf %61, %62 : vector<8x1xf32>
    %64 = vector.broadcast %63 : vector<8x1xf32> to vector<8x8xf32>
    %65 = arith.divf %59, %64 : vector<8x8xf32>
    %66 = arith.truncf %65 : vector<8x8xf32> to vector<8x8xbf16>
    %cst_26 = arith.constant dense<0.000000e+00> : vector<8x8xf32>
    %67 = tpu.matmul %66, %47, %cst_26 {dimension_numbers = #tpu.dot_dimension_numbers<[1], [0], [0], [1], [0, 0, 1, 1], [], []>} : vector<8x8xbf16>, vector<8x8xbf16>, vector<8x8xf32> -> vector<8x8xf32>
    %68 = arith.truncf %67 : vector<8x8xf32> to vector<8x8xbf16>
    %c0_27 = arith.constant 0 : index
    %c0_28 = arith.constant 0 : index
    %69 = vector.load %arg7[%c0_27, %c0_28] : memref<32x32xbf16, #tpu.memory_space<vmem>>, vector<8x32xbf16>
    %cst_29 = arith.constant dense<0.000000e+00> : vector<8x32xf32>
    %70 = tpu.matmul %68, %69, %cst_29 {dimension_numbers = #tpu.dot_dimension_numbers<[1], [0], [0], [1], [0, 0, 1, 1], [], []>} : vector<8x8xbf16>, vector<8x32xbf16>, vector<8x32xf32> -> vector<8x32xf32>
    %71 = arith.addf %41, %70 : vector<8x32xf32>
    %72 = vector.extract_strided_slice %31 {offsets = [0, 8], sizes = [8, 8], strides = [1, 1]} : vector<8x96xf32> to vector<8x8xf32>
    %73 = arith.truncf %72 : vector<8x8xf32> to vector<8x8xbf16>
    %74 = vector.extract_strided_slice %31 {offsets = [0, 40], sizes = [8, 8], strides = [1, 1]} : vector<8x96xf32> to vector<8x8xf32>
    %75 = arith.truncf %74 : vector<8x8xf32> to vector<8x8xbf16>
    %76 = vector.extract_strided_slice %31 {offsets = [0, 72], sizes = [8, 8], strides = [1, 1]} : vector<8x96xf32> to vector<8x8xf32>
    %77 = arith.truncf %76 : vector<8x8xf32> to vector<8x8xbf16>
    %cst_30 = arith.constant dense<0.000000e+00> : vector<8x8xf32>
    %78 = tpu.matmul %73, %75, %cst_30 {dimension_numbers = #tpu.dot_dimension_numbers<[1], [1], [0], [0], [0, 0, 1, 0], [], []>} : vector<8x8xbf16>, vector<8x8xbf16>, vector<8x8xf32> -> vector<8x8xf32>
    %cst_31 = arith.constant 0.353553385 : f32
    %79 = vector.broadcast %cst_31 : f32 to vector<8x8xf32>
    %80 = arith.mulf %78, %79 : vector<8x8xf32>
    %cst_32 = arith.constant -1.000000e+30 : f32
    %81 = vector.broadcast %cst_32 : f32 to vector<8x8xf32>
    %82 = arith.select %40, %80, %81 : vector<8x8xi1>, vector<8x8xf32>
    %cst_33 = arith.constant dense<0xFF800000> : vector<8xf32>
    %83 = vector.multi_reduction <maximumf>, %82, %cst_33 [1] : vector<8x8xf32> to vector<8xf32>
    %84 = vector.shape_cast %83 : vector<8xf32> to vector<8x1xf32>
    %85 = vector.broadcast %84 : vector<8x1xf32> to vector<8x8xf32>
    %86 = arith.subf %82, %85 : vector<8x8xf32>
    %87 = math.exp %86 : vector<8x8xf32>
    %cst_34 = arith.constant 0.000000e+00 : f32
    %88 = vector.broadcast %cst_34 : f32 to vector<8x8xf32>
    %89 = arith.select %40, %87, %88 : vector<8x8xi1>, vector<8x8xf32>
    %cst_35 = arith.constant dense<0.000000e+00> : vector<8xf32>
    %90 = vector.multi_reduction <add>, %89, %cst_35 [1] : vector<8x8xf32> to vector<8xf32>
    %91 = vector.shape_cast %90 : vector<8xf32> to vector<8x1xf32>
    %cst_36 = arith.constant 1.000000e-30 : f32
    %92 = vector.broadcast %cst_36 : f32 to vector<8x1xf32>
    %93 = arith.maximumf %91, %92 : vector<8x1xf32>
    %94 = vector.broadcast %93 : vector<8x1xf32> to vector<8x8xf32>
    %95 = arith.divf %89, %94 : vector<8x8xf32>
    %96 = arith.truncf %95 : vector<8x8xf32> to vector<8x8xbf16>
    %cst_37 = arith.constant dense<0.000000e+00> : vector<8x8xf32>
    %97 = tpu.matmul %96, %77, %cst_37 {dimension_numbers = #tpu.dot_dimension_numbers<[1], [0], [0], [1], [0, 0, 1, 1], [], []>} : vector<8x8xbf16>, vector<8x8xbf16>, vector<8x8xf32> -> vector<8x8xf32>
    %98 = arith.truncf %97 : vector<8x8xf32> to vector<8x8xbf16>
    %c8 = arith.constant 8 : index
    %c0_38 = arith.constant 0 : index
    %99 = vector.load %arg7[%c8, %c0_38] : memref<32x32xbf16, #tpu.memory_space<vmem>>, vector<8x32xbf16>
    %cst_39 = arith.constant dense<0.000000e+00> : vector<8x32xf32>
    %100 = tpu.matmul %98, %99, %cst_39 {dimension_numbers = #tpu.dot_dimension_numbers<[1], [0], [0], [1], [0, 0, 1, 1], [], []>} : vector<8x8xbf16>, vector<8x32xbf16>, vector<8x32xf32> -> vector<8x32xf32>
    %101 = arith.addf %71, %100 : vector<8x32xf32>
    %102 = vector.extract_strided_slice %31 {offsets = [0, 16], sizes = [8, 8], strides = [1, 1]} : vector<8x96xf32> to vector<8x8xf32>
    %103 = arith.truncf %102 : vector<8x8xf32> to vector<8x8xbf16>
    %104 = vector.extract_strided_slice %31 {offsets = [0, 48], sizes = [8, 8], strides = [1, 1]} : vector<8x96xf32> to vector<8x8xf32>
    %105 = arith.truncf %104 : vector<8x8xf32> to vector<8x8xbf16>
    %106 = vector.extract_strided_slice %31 {offsets = [0, 80], sizes = [8, 8], strides = [1, 1]} : vector<8x96xf32> to vector<8x8xf32>
    %107 = arith.truncf %106 : vector<8x8xf32> to vector<8x8xbf16>
    %cst_40 = arith.constant dense<0.000000e+00> : vector<8x8xf32>
    %108 = tpu.matmul %103, %105, %cst_40 {dimension_numbers = #tpu.dot_dimension_numbers<[1], [1], [0], [0], [0, 0, 1, 0], [], []>} : vector<8x8xbf16>, vector<8x8xbf16>, vector<8x8xf32> -> vector<8x8xf32>
    %cst_41 = arith.constant 0.353553385 : f32
    %109 = vector.broadcast %cst_41 : f32 to vector<8x8xf32>
    %110 = arith.mulf %108, %109 : vector<8x8xf32>
    %cst_42 = arith.constant -1.000000e+30 : f32
    %111 = vector.broadcast %cst_42 : f32 to vector<8x8xf32>
    %112 = arith.select %40, %110, %111 : vector<8x8xi1>, vector<8x8xf32>
    %cst_43 = arith.constant dense<0xFF800000> : vector<8xf32>
    %113 = vector.multi_reduction <maximumf>, %112, %cst_43 [1] : vector<8x8xf32> to vector<8xf32>
    %114 = vector.shape_cast %113 : vector<8xf32> to vector<8x1xf32>
    %115 = vector.broadcast %114 : vector<8x1xf32> to vector<8x8xf32>
    %116 = arith.subf %112, %115 : vector<8x8xf32>
    %117 = math.exp %116 : vector<8x8xf32>
    %cst_44 = arith.constant 0.000000e+00 : f32
    %118 = vector.broadcast %cst_44 : f32 to vector<8x8xf32>
    %119 = arith.select %40, %117, %118 : vector<8x8xi1>, vector<8x8xf32>
    %cst_45 = arith.constant dense<0.000000e+00> : vector<8xf32>
    %120 = vector.multi_reduction <add>, %119, %cst_45 [1] : vector<8x8xf32> to vector<8xf32>
    %121 = vector.shape_cast %120 : vector<8xf32> to vector<8x1xf32>
    %cst_46 = arith.constant 1.000000e-30 : f32
    %122 = vector.broadcast %cst_46 : f32 to vector<8x1xf32>
    %123 = arith.maximumf %121, %122 : vector<8x1xf32>
    %124 = vector.broadcast %123 : vector<8x1xf32> to vector<8x8xf32>
    %125 = arith.divf %119, %124 : vector<8x8xf32>
    %126 = arith.truncf %125 : vector<8x8xf32> to vector<8x8xbf16>
    %cst_47 = arith.constant dense<0.000000e+00> : vector<8x8xf32>
    %127 = tpu.matmul %126, %107, %cst_47 {dimension_numbers = #tpu.dot_dimension_numbers<[1], [0], [0], [1], [0, 0, 1, 1], [], []>} : vector<8x8xbf16>, vector<8x8xbf16>, vector<8x8xf32> -> vector<8x8xf32>
    %128 = arith.truncf %127 : vector<8x8xf32> to vector<8x8xbf16>
    %c16 = arith.constant 16 : index
    %c0_48 = arith.constant 0 : index
    %129 = vector.load %arg7[%c16, %c0_48] : memref<32x32xbf16, #tpu.memory_space<vmem>>, vector<8x32xbf16>
    %cst_49 = arith.constant dense<0.000000e+00> : vector<8x32xf32>
    %130 = tpu.matmul %128, %129, %cst_49 {dimension_numbers = #tpu.dot_dimension_numbers<[1], [0], [0], [1], [0, 0, 1, 1], [], []>} : vector<8x8xbf16>, vector<8x32xbf16>, vector<8x32xf32> -> vector<8x32xf32>
    %131 = arith.addf %101, %130 : vector<8x32xf32>
    %132 = vector.extract_strided_slice %31 {offsets = [0, 24], sizes = [8, 8], strides = [1, 1]} : vector<8x96xf32> to vector<8x8xf32>
    %133 = arith.truncf %132 : vector<8x8xf32> to vector<8x8xbf16>
    %134 = vector.extract_strided_slice %31 {offsets = [0, 56], sizes = [8, 8], strides = [1, 1]} : vector<8x96xf32> to vector<8x8xf32>
    %135 = arith.truncf %134 : vector<8x8xf32> to vector<8x8xbf16>
    %136 = vector.extract_strided_slice %31 {offsets = [0, 88], sizes = [8, 8], strides = [1, 1]} : vector<8x96xf32> to vector<8x8xf32>
    %137 = arith.truncf %136 : vector<8x8xf32> to vector<8x8xbf16>
    %cst_50 = arith.constant dense<0.000000e+00> : vector<8x8xf32>
    %138 = tpu.matmul %133, %135, %cst_50 {dimension_numbers = #tpu.dot_dimension_numbers<[1], [1], [0], [0], [0, 0, 1, 0], [], []>} : vector<8x8xbf16>, vector<8x8xbf16>, vector<8x8xf32> -> vector<8x8xf32>
    %cst_51 = arith.constant 0.353553385 : f32
    %139 = vector.broadcast %cst_51 : f32 to vector<8x8xf32>
    %140 = arith.mulf %138, %139 : vector<8x8xf32>
    %cst_52 = arith.constant -1.000000e+30 : f32
    %141 = vector.broadcast %cst_52 : f32 to vector<8x8xf32>
    %142 = arith.select %40, %140, %141 : vector<8x8xi1>, vector<8x8xf32>
    %cst_53 = arith.constant dense<0xFF800000> : vector<8xf32>
    %143 = vector.multi_reduction <maximumf>, %142, %cst_53 [1] : vector<8x8xf32> to vector<8xf32>
    %144 = vector.shape_cast %143 : vector<8xf32> to vector<8x1xf32>
    %145 = vector.broadcast %144 : vector<8x1xf32> to vector<8x8xf32>
    %146 = arith.subf %142, %145 : vector<8x8xf32>
    %147 = math.exp %146 : vector<8x8xf32>
    %cst_54 = arith.constant 0.000000e+00 : f32
    %148 = vector.broadcast %cst_54 : f32 to vector<8x8xf32>
    %149 = arith.select %40, %147, %148 : vector<8x8xi1>, vector<8x8xf32>
    %cst_55 = arith.constant dense<0.000000e+00> : vector<8xf32>
    %150 = vector.multi_reduction <add>, %149, %cst_55 [1] : vector<8x8xf32> to vector<8xf32>
    %151 = vector.shape_cast %150 : vector<8xf32> to vector<8x1xf32>
    %cst_56 = arith.constant 1.000000e-30 : f32
    %152 = vector.broadcast %cst_56 : f32 to vector<8x1xf32>
    %153 = arith.maximumf %151, %152 : vector<8x1xf32>
    %154 = vector.broadcast %153 : vector<8x1xf32> to vector<8x8xf32>
    %155 = arith.divf %149, %154 : vector<8x8xf32>
    %156 = arith.truncf %155 : vector<8x8xf32> to vector<8x8xbf16>
    %cst_57 = arith.constant dense<0.000000e+00> : vector<8x8xf32>
    %157 = tpu.matmul %156, %137, %cst_57 {dimension_numbers = #tpu.dot_dimension_numbers<[1], [0], [0], [1], [0, 0, 1, 1], [], []>} : vector<8x8xbf16>, vector<8x8xbf16>, vector<8x8xf32> -> vector<8x8xf32>
    %158 = arith.truncf %157 : vector<8x8xf32> to vector<8x8xbf16>
    %c24 = arith.constant 24 : index
    %c0_58 = arith.constant 0 : index
    %159 = vector.load %arg7[%c24, %c0_58] : memref<32x32xbf16, #tpu.memory_space<vmem>>, vector<8x32xbf16>
    %cst_59 = arith.constant dense<0.000000e+00> : vector<8x32xf32>
    %160 = tpu.matmul %158, %159, %cst_59 {dimension_numbers = #tpu.dot_dimension_numbers<[1], [0], [0], [1], [0, 0, 1, 1], [], []>} : vector<8x8xbf16>, vector<8x32xbf16>, vector<8x32xf32> -> vector<8x32xf32>
    %161 = arith.addf %131, %160 : vector<8x32xf32>
    %162 = arith.addf %1, %161 : vector<8x32xf32>
    %c0_60 = arith.constant 0 : index
    %c0_61 = arith.constant 0 : index
    %163 = vector.load %arg8[%c0_60, %c0_61] : memref<1x32xf32, #tpu.memory_space<vmem>>, vector<1x32xf32>
    %164 = vector.broadcast %163 : vector<1x32xf32> to vector<8x32xf32>
    %165 = arith.addf %162, %164 : vector<8x32xf32>
    %cst_62 = arith.constant dense<0.000000e+00> : vector<8xf32>
    %166 = vector.multi_reduction <add>, %165, %cst_62 [1] : vector<8x32xf32> to vector<8xf32>
    %167 = vector.shape_cast %166 : vector<8xf32> to vector<8x1xf32>
    %cst_63 = arith.constant 3.200000e+01 : f32
    %168 = vector.broadcast %cst_63 : f32 to vector<8x1xf32>
    %169 = arith.divf %167, %168 : vector<8x1xf32>
    %170 = vector.broadcast %169 : vector<8x1xf32> to vector<8x32xf32>
    %171 = arith.subf %165, %170 : vector<8x32xf32>
    %172 = arith.mulf %171, %171 : vector<8x32xf32>
    %cst_64 = arith.constant dense<0.000000e+00> : vector<8xf32>
    %173 = vector.multi_reduction <add>, %172, %cst_64 [1] : vector<8x32xf32> to vector<8xf32>
    %174 = vector.shape_cast %173 : vector<8xf32> to vector<8x1xf32>
    %cst_65 = arith.constant 3.200000e+01 : f32
    %175 = vector.broadcast %cst_65 : f32 to vector<8x1xf32>
    %176 = arith.divf %174, %175 : vector<8x1xf32>
    %177 = vector.broadcast %169 : vector<8x1xf32> to vector<8x32xf32>
    %178 = arith.subf %165, %177 : vector<8x32xf32>
    %cst_66 = arith.constant 9.99999974E-6 : f32
    %179 = vector.broadcast %cst_66 : f32 to vector<8x1xf32>
    %180 = arith.addf %176, %179 : vector<8x1xf32>
    %181 = math.rsqrt %180 : vector<8x1xf32>
    %182 = vector.broadcast %181 : vector<8x1xf32> to vector<8x32xf32>
    %183 = arith.mulf %178, %182 : vector<8x32xf32>
    %c0_67 = arith.constant 0 : index
    %c0_68 = arith.constant 0 : index
    %184 = vector.load %arg9[%c0_67, %c0_68] : memref<1x32xf32, #tpu.memory_space<vmem>>, vector<1x32xf32>
    %185 = vector.broadcast %184 : vector<1x32xf32> to vector<8x32xf32>
    %186 = arith.mulf %183, %185 : vector<8x32xf32>
    %c0_69 = arith.constant 0 : index
    %c0_70 = arith.constant 0 : index
    %187 = vector.load %arg10[%c0_69, %c0_70] : memref<1x32xf32, #tpu.memory_space<vmem>>, vector<1x32xf32>
    %188 = vector.broadcast %187 : vector<1x32xf32> to vector<8x32xf32>
    %189 = arith.addf %186, %188 : vector<8x32xf32>
    %190 = arith.truncf %189 : vector<8x32xf32> to vector<8x32xbf16>
    %c0_71 = arith.constant 0 : index
    %c0_72 = arith.constant 0 : index
    %191 = vector.load %arg11[%c0_71, %c0_72] : memref<32x128xbf16, #tpu.memory_space<vmem>>, vector<32x128xbf16>
    %cst_73 = arith.constant dense<0.000000e+00> : vector<8x128xf32>
    %192 = tpu.matmul %190, %191, %cst_73 {dimension_numbers = #tpu.dot_dimension_numbers<[1], [0], [0], [1], [0, 0, 1, 1], [], []>} : vector<8x32xbf16>, vector<32x128xbf16>, vector<8x128xf32> -> vector<8x128xf32>
    %c0_74 = arith.constant 0 : index
    %c0_75 = arith.constant 0 : index
    %193 = vector.load %arg12[%c0_74, %c0_75] : memref<1x128xf32, #tpu.memory_space<vmem>>, vector<1x128xf32>
    %194 = vector.broadcast %193 : vector<1x128xf32> to vector<8x128xf32>
    %195 = arith.addf %192, %194 : vector<8x128xf32>
    %cst_76 = arith.constant 5.000000e-01 : f32
    %196 = vector.broadcast %cst_76 : f32 to vector<8x128xf32>
    %197 = arith.mulf %196, %195 : vector<8x128xf32>
    %cst_77 = arith.constant 4.471500e-02 : f32
    %198 = vector.broadcast %cst_77 : f32 to vector<8x128xf32>
    %199 = arith.mulf %198, %195 : vector<8x128xf32>
    %200 = arith.mulf %199, %195 : vector<8x128xf32>
    %201 = arith.mulf %200, %195 : vector<8x128xf32>
    %202 = arith.addf %195, %201 : vector<8x128xf32>
    %cst_78 = arith.constant 0.797884583 : f32
    %203 = vector.broadcast %cst_78 : f32 to vector<8x128xf32>
    %204 = arith.mulf %203, %202 : vector<8x128xf32>
    %205 = math.tanh %204 : vector<8x128xf32>
    %cst_79 = arith.constant 1.000000e+00 : f32
    %206 = vector.broadcast %cst_79 : f32 to vector<8x128xf32>
    %207 = arith.addf %206, %205 : vector<8x128xf32>
    %208 = arith.mulf %197, %207 : vector<8x128xf32>
    %209 = arith.truncf %208 : vector<8x128xf32> to vector<8x128xbf16>
    %c0_80 = arith.constant 0 : index
    %c0_81 = arith.constant 0 : index
    %210 = vector.load %arg13[%c0_80, %c0_81] : memref<128x32xbf16, #tpu.memory_space<vmem>>, vector<128x32xbf16>
    %cst_82 = arith.constant dense<0.000000e+00> : vector<8x32xf32>
    %211 = tpu.matmul %209, %210, %cst_82 {dimension_numbers = #tpu.dot_dimension_numbers<[1], [0], [0], [1], [0, 0, 1, 1], [], []>} : vector<8x128xbf16>, vector<128x32xbf16>, vector<8x32xf32> -> vector<8x32xf32>
    %c0_83 = arith.constant 0 : index
    %c0_84 = arith.constant 0 : index
    %212 = vector.load %arg14[%c0_83, %c0_84] : memref<1x32xf32, #tpu.memory_space<vmem>>, vector<1x32xf32>
    %213 = vector.broadcast %212 : vector<1x32xf32> to vector<8x32xf32>
    %214 = arith.addf %211, %213 : vector<8x32xf32>
    %215 = arith.addf %165, %214 : vector<8x32xf32>
    %c0_85 = arith.constant 0 : index
    %c0_86 = arith.constant 0 : index
    %c0_87 = arith.constant 0 : index
    %216 = vector.load %arg15[%c0_85, %c0_86, %c0_87] : memref<1x8x32xf32, #tpu.memory_space<vmem>>, vector<1x8x32xf32>
    %217 = vector.shape_cast %216 : vector<1x8x32xf32> to vector<8x32xf32>
    %218 = vector.shape_cast %215 : vector<8x32xf32> to vector<1x8x32xf32>
    tpu.vector_store %arg15[%c0_85, %c0_86, %c0_87], %218 {strides = array<i32>} : memref<1x8x32xf32, #tpu.memory_space<vmem>>, vector<1x8x32xf32>,
    return
  }
  func.func @transform_0(%arg0: i32) -> (i32, i32, i32) {
    %c0_i32 = arith.constant 0 : i32
    %c0_i32_0 = arith.constant 0 : i32
    %c0_i32_1 = arith.constant 0 : i32
    return %arg0, %c0_i32, %c0_i32_0 : i32, i32, i32
  }
  func.func @transform_1(%arg0: i32) -> (i32, i32, i32) {
    %c0_i32 = arith.constant 0 : i32
    %c0_i32_0 = arith.constant 0 : i32
    %c0_i32_1 = arith.constant 0 : i32
    return %arg0, %c0_i32, %c0_i32_0 : i32, i32, i32
  }
  func.func @transform_2(%arg0: i32) -> (i32, i32) {
    %c0_i32 = arith.constant 0 : i32
    %c0_i32_0 = arith.constant 0 : i32
    %c0_i32_1 = arith.constant 0 : i32
    return %c0_i32, %c0_i32_0 : i32, i32
  }
  func.func @transform_3(%arg0: i32) -> (i32, i32) {
    %c0_i32 = arith.constant 0 : i32
    %c0_i32_0 = arith.constant 0 : i32
    %c0_i32_1 = arith.constant 0 : i32
    return %c0_i32, %c0_i32_0 : i32, i32
  }
  func.func @transform_4(%arg0: i32) -> (i32, i32) {
    %c0_i32 = arith.constant 0 : i32
    %c0_i32_0 = arith.constant 0 : i32
    %c0_i32_1 = arith.constant 0 : i32
    return %c0_i32, %c0_i32_0 : i32, i32
  }
  func.func @transform_5(%arg0: i32) -> (i32, i32) {
    %c0_i32 = arith.constant 0 : i32
    %c0_i32_0 = arith.constant 0 : i32
    %c0_i32_1 = arith.constant 0 : i32
    return %c0_i32, %c0_i32_0 : i32, i32
  }
  func.func @transform_6(%arg0: i32) -> (i32, i32) {
    %c0_i32 = arith.constant 0 : i32
    %c0_i32_0 = arith.constant 0 : i32
    %c0_i32_1 = arith.constant 0 : i32
    return %c0_i32, %c0_i32_0 : i32, i32
  }
  func.func @transform_7(%arg0: i32) -> (i32, i32) {
    %c0_i32 = arith.constant 0 : i32
    %c0_i32_0 = arith.constant 0 : i32
    %c0_i32_1 = arith.constant 0 : i32
    return %c0_i32, %c0_i32_0 : i32, i32
  }
  func.func @transform_8(%arg0: i32) -> (i32, i32) {
    %c0_i32 = arith.constant 0 : i32
    %c0_i32_0 = arith.constant 0 : i32
    %c0_i32_1 = arith.constant 0 : i32
    return %c0_i32, %c0_i32_0 : i32, i32
  }
  func.func @transform_9(%arg0: i32) -> (i32, i32) {
    %c0_i32 = arith.constant 0 : i32
    %c0_i32_0 = arith.constant 0 : i32
    %c0_i32_1 = arith.constant 0 : i32
    return %c0_i32, %c0_i32_0 : i32, i32
  }
  func.func @transform_10(%arg0: i32) -> (i32, i32) {
    %c0_i32 = arith.constant 0 : i32
    %c0_i32_0 = arith.constant 0 : i32
    %c0_i32_1 = arith.constant 0 : i32
    return %c0_i32, %c0_i32_0 : i32, i32
  }
  func.func @transform_11(%arg0: i32) -> (i32, i32) {
    %c0_i32 = arith.constant 0 : i32
    %c0_i32_0 = arith.constant 0 : i32
    %c0_i32_1 = arith.constant 0 : i32
    return %c0_i32, %c0_i32_0 : i32, i32
  }
  func.func @transform_12(%arg0: i32) -> (i32, i32) {
    %c0_i32 = arith.constant 0 : i32
    %c0_i32_0 = arith.constant 0 : i32
    %c0_i32_1 = arith.constant 0 : i32
    return %c0_i32, %c0_i32_0 : i32, i32
  }
  func.func @transform_13(%arg0: i32) -> (i32, i32) {
    %c0_i32 = arith.constant 0 : i32
    %c0_i32_0 = arith.constant 0 : i32
    %c0_i32_1 = arith.constant 0 : i32
    return %c0_i32, %c0_i32_0 : i32, i32
  }
  func.func @transform_14(%arg0: i32) -> (i32, i32, i32) {
    %c0_i32 = arith.constant 0 : i32
    %c0_i32_0 = arith.constant 0 : i32
    %c0_i32_1 = arith.constant 0 : i32
    return %arg0, %c0_i32, %c0_i32_0 : i32, i32, i32
  }
}

</mosaic_0001>

<llo_original>
// kernel: tpu_custom_call.1
$region0: #{tpu_custom_call.1}
  #allocation0 [shape = 'u32[]', space=smem, size = 0x4, offset = 0x4, fixed_abs, tag = 'smem constant byte address 0x4 - core index']
  #allocation1 [shape = 'u32[72,128]{1,0:T(1,128)}', space=vmem, size = 0x9000, scoped, tag = 'internal scratch']
  %s0 = inlined_call_operand.vmem [shape: f32[2,8,32], index: 0, kind: input, shape index: {}]
  %s1 = inlined_call_operand.vmem [shape: s32[2,1,8], index: 1, kind: input, shape index: {}]
  %s2 = inlined_call_operand.vmem [shape: f32[1,32], index: 2, kind: input, shape index: {}]
  %s3 = inlined_call_operand.vmem [shape: f32[1,32], index: 3, kind: input, shape index: {}]
  %s4 = inlined_call_operand.vmem [shape: bf16[32,96], index: 4, kind: input, shape index: {}]
  %s5 = inlined_call_operand.vmem [shape: f32[1,96], index: 5, kind: input, shape index: {}]
  %s6 = inlined_call_operand.vmem [shape: bf16[32,32], index: 6, kind: input, shape index: {}]
  %s7 = inlined_call_operand.vmem [shape: f32[1,32], index: 7, kind: input, shape index: {}]
  %s8 = inlined_call_operand.vmem [shape: f32[1,32], index: 8, kind: input, shape index: {}]
  %s9 = inlined_call_operand.vmem [shape: f32[1,32], index: 9, kind: input, shape index: {}]
  %s10 = inlined_call_operand.vmem [shape: bf16[32,128], index: 10, kind: input, shape index: {}]
  %s11 = inlined_call_operand.vmem [shape: f32[1,128], index: 11, kind: input, shape index: {}]
  %s12 = inlined_call_operand.vmem [shape: bf16[128,32], index: 12, kind: input, shape index: {}]
  %s13 = inlined_call_operand.vmem [shape: f32[1,32], index: 13, kind: input, shape index: {}]
  %s14 = inlined_call_operand.hbm [shape: f32[2,8,32], index: 14, kind: output, shape index: {}]
  %s15 = sld [smem:[#allocation0]]
  $region89: #{tpu_custom_call.1} parent=0
    _
  %s17 = ssub.s32 1, %s15
  %s18 = scalar_select 0, %s17, %s15
  $region1: #{tpu_custom_call.1} parent=0
    #allocation2 [shape = 'u8[8192]{0}', space=vmem, size = 0x2000, scoped, tag = 'output window, operand 0']
    #allocation3 [shape = 's32[2]{0}', space=sflag, size = 0x8, scoped, tag = 'scoped memory for tpu_custom_call.1']
    %19 = vsyncpa [#allocation3], 0
    %s20 = scalar_lea.sflag [#allocation3], 1
    %21 = vsyncpa %s20, 0
    loop: start=0, step=1, limit=4
    $region2: #{tpu_custom_call.1} parent=1 // loop_pre_header
      _
    $region3: #{tpu_custom_call.1} parent=1 // loop_header
      %s23 = sphi 0, %s27
      %p24 = scmp.ge.s32.totalorder %s23, 4
      %s33 = sphi 0, %s35
      %s36 = sphi 0, %s33
      %s37 = sphi 0, %s36
      %s53 = sphi 0, %s37
      %s59 = sphi 0, %s61
      %s62 = sphi 0, %s59
      %s63 = sphi 0, %s62
      %s79 = sphi 0, %s63
      %s83 = sphi 0, %s83
      %s85 = sphi 0, %s83
      %s86 = sphi 0, %s85
      %s100 = sphi 0, %s86
      %s104 = sphi 0, %s104
      %s106 = sphi 0, %s104
      %s107 = sphi 0, %s106
      %s121 = sphi 0, %s107
      %s125 = sphi 0, %s125
      %s127 = sphi 0, %s125
      %s128 = sphi 0, %s127
      %s142 = sphi 0, %s128
      %s146 = sphi 0, %s146
      %s148 = sphi 0, %s146
      %s149 = sphi 0, %s148
      %s163 = sphi 0, %s149
      %s167 = sphi 0, %s167
      %s169 = sphi 0, %s167
      %s170 = sphi 0, %s169
      %s184 = sphi 0, %s170
      %s188 = sphi 0, %s188
      %s190 = sphi 0, %s188
      %s191 = sphi 0, %s190
      %s205 = sphi 0, %s191
      %s209 = sphi 0, %s209
      %s211 = sphi 0, %s209
      %s212 = sphi 0, %s211
      %s226 = sphi 0, %s212
      %s230 = sphi 0, %s230
      %s232 = sphi 0, %s230
      %s233 = sphi 0, %s232
      %s247 = sphi 0, %s233
      %s251 = sphi 0, %s251
      %s253 = sphi 0, %s251
      %s254 = sphi 0, %s253
      %s268 = sphi 0, %s254
      %s272 = sphi 0, %s272
      %s274 = sphi 0, %s272
      %s275 = sphi 0, %s274
      %s289 = sphi 0, %s275
      %s293 = sphi 0, %s293
      %s295 = sphi 0, %s293
      %s296 = sphi 0, %s295
      %s310 = sphi 0, %s296
      %s314 = sphi 0, %s314
      %s316 = sphi 0, %s314
      %s317 = sphi 0, %s316
      %s331 = sphi 0, %s317
      %s337 = sphi 0, %s339
      %s340 = sphi 0, %s337
      %s341 = sphi 0, %s340
      %s357 = sphi 0, %s341
    $region4: #{tpu_custom_call.1} parent=1 // loop_header_branch
      %26 = sbr.rel (%p24) target = $region8
    $region5: #{tpu_custom_call.1} parent=1 // loop_body
      %s28 = ssub.s32 %s23, 1
      %s29 = ssub.s32 %s23, 2
      %s30 = sadd.s32 %s23, 1
      %s31 = ssub.s32 %s23, %s30
      %p32 = scmp.eq.s32.totalorder %s31, 0
      %s34 = sadd.s32 %s33, 1
      %s35 = scalar_select %p32, %s33, %s34
      %p38 = pneg %p32
      %p39 = scmp.eq.s32.totalorder %s23, 1
      %p40 = por %p38, %p39
      %p41 = scmp.ne.s32.totalorder %s33, %s36
      %p42 = scmp.eq.s32.totalorder %s23, 0
      %p43 = por %p41, %p42
      %p44 = scmp.ne.s32.totalorder %s33, %s36
      %p45 = scmp.eq.s32.totalorder %s28, 1
      %p46 = por %p44, %p45
      %p47 = scmp.ne.s32.totalorder %s36, %s37
      %p48 = scmp.eq.s32.totalorder %s28, 0
      %p49 = por %p47, %p48
      %p50 = scmp.ne.s32.totalorder %s36, %s37
      %p51 = scmp.eq.s32.totalorder %s29, 1
      %p52 = por %p50, %p51
      %p54 = scmp.ne.s32.totalorder %s37, %s53
      %p55 = scmp.eq.s32.totalorder %s29, 0
      %p56 = por %p54, %p55
      %s57 = ssub.s32 %s23, %s30
      %p58 = scmp.eq.s32.totalorder %s57, 0
      %s60 = sadd.s32 %s59, 1
      %s61 = scalar_select %p58, %s59, %s60
      %p64 = pneg %p58
      %p65 = scmp.eq.s32.totalorder %s23, 1
      %p66 = por %p64, %p65
      %p67 = scmp.ne.s32.totalorder %s59, %s62
      %p68 = scmp.eq.s32.totalorder %s23, 0
      %p69 = por %p67, %p68
      %p70 = scmp.ne.s32.totalorder %s59, %s62
      %p71 = scmp.eq.s32.totalorder %s28, 1
      %p72 = por %p70, %p71
      %p73 = scmp.ne.s32.totalorder %s62, %s63
      %p74 = scmp.eq.s32.totalorder %s28, 0
      %p75 = por %p73, %p74
      %p76 = scmp.ne.s32.totalorder %s62, %s63
      %p77 = scmp.eq.s32.totalorder %s29, 1
      %p78 = por %p76, %p77
      %p80 = scmp.ne.s32.totalorder %s63, %s79
      %p81 = scmp.eq.s32.totalorder %s29, 0
      %p82 = por %p80, %p81
      %s84 = sadd.s32 %s83, 1
      %p87 = scmp.eq.s32.totalorder %s23, 1
      %p88 = scmp.ne.s32.totalorder %s83, %s85
      %p89 = scmp.eq.s32.totalorder %s23, 0
      %p90 = por %p88, %p89
      %p91 = scmp.ne.s32.totalorder %s83, %s85
      %p92 = scmp.eq.s32.totalorder %s28, 1
      %p93 = por %p91, %p92
      %p94 = scmp.ne.s32.totalorder %s85, %s86
      %p95 = scmp.eq.s32.totalorder %s28, 0
      %p96 = por %p94, %p95
      %p97 = scmp.ne.s32.totalorder %s85, %s86
      %p98 = scmp.eq.s32.totalorder %s29, 1
      %p99 = por %p97, %p98
      %p101 = scmp.ne.s32.totalorder %s86, %s100
      %p102 = scmp.eq.s32.totalorder %s29, 0
      %p103 = por %p101, %p102
      %s105 = sadd.s32 %s104, 1
      %p108 = scmp.eq.s32.totalorder %s23, 1
      %p109 = scmp.ne.s32.totalorder %s104, %s106
      %p110 = scmp.eq.s32.totalorder %s23, 0
      %p111 = por %p109, %p110
      %p112 = scmp.ne.s32.totalorder %s104, %s106
      %p113 = scmp.eq.s32.totalorder %s28, 1
      %p114 = por %p112, %p113
      %p115 = scmp.ne.s32.totalorder %s106, %s107
      %p116 = scmp.eq.s32.totalorder %s28, 0
      %p117 = por %p115, %p116
      %p118 = scmp.ne.s32.totalorder %s106, %s107
      %p119 = scmp.eq.s32.totalorder %s29, 1
      %p120 = por %p118, %p119
      %p122 = scmp.ne.s32.totalorder %s107, %s121
      %p123 = scmp.eq.s32.totalorder %s29, 0
      %p124 = por %p122, %p123
      %s126 = sadd.s32 %s125, 1
      %p129 = scmp.eq.s32.totalorder %s23, 1
      %p130 = scmp.ne.s32.totalorder %s125, %s127
      %p131 = scmp.eq.s32.totalorder %s23, 0
      %p132 = por %p130, %p131
      %p133 = scmp.ne.s32.totalorder %s125, %s127
      %p134 = scmp.eq.s32.totalorder %s28, 1
      %p135 = por %p133, %p134
      %p136 = scmp.ne.s32.totalorder %s127, %s128
      %p137 = scmp.eq.s32.totalorder %s28, 0
      %p138 = por %p136, %p137
      %p139 = scmp.ne.s32.totalorder %s127, %s128
      %p140 = scmp.eq.s32.totalorder %s29, 1
      %p141 = por %p139, %p140
      %p143 = scmp.ne.s32.totalorder %s128, %s142
      %p144 = scmp.eq.s32.totalorder %s29, 0
      %p145 = por %p143, %p144
      %s147 = sadd.s32 %s146, 1
      %p150 = scmp.eq.s32.totalorder %s23, 1
      %p151 = scmp.ne.s32.totalorder %s146, %s148
      %p152 = scmp.eq.s32.totalorder %s23, 0
      %p153 = por %p151, %p152
      %p154 = scmp.ne.s32.totalorder %s146, %s148
      %p155 = scmp.eq.s32.totalorder %s28, 1
      %p156 = por %p154, %p155
      %p157 = scmp.ne.s32.totalorder %s148, %s149
      %p158 = scmp.eq.s32.totalorder %s28, 0
      %p159 = por %p157, %p158
      %p160 = scmp.ne.s32.totalorder %s148, %s149
      %p161 = scmp.eq.s32.totalorder %s29, 1
      %p162 = por %p160, %p161
      %p164 = scmp.ne.s32.totalorder %s149, %s163
      %p165 = scmp.eq.s32.totalorder %s29, 0
      %p166 = por %p164, %p165
      %s168 = sadd.s32 %s167, 1
      %p171 = scmp.eq.s32.totalorder %s23, 1
      %p172 = scmp.ne.s32.totalorder %s167, %s169
      %p173 = scmp.eq.s32.totalorder %s23, 0
      %p174 = por %p172, %p173
      %p175 = scmp.ne.s32.totalorder %s167, %s169
      %p176 = scmp.eq.s32.totalorder %s28, 1
      %p177 = por %p175, %p176
      %p178 = scmp.ne.s32.totalorder %s169, %s170
      %p179 = scmp.eq.s32.totalorder %s28, 0
      %p180 = por %p178, %p179
      %p181 = scmp.ne.s32.totalorder %s169, %s170
      %p182 = scmp.eq.s32.totalorder %s29, 1
      %p183 = por %p181, %p182
      %p185 = scmp.ne.s32.totalorder %s170, %s184
      %p186 = scmp.eq.s32.totalorder %s29, 0
      %p187 = por %p185, %p186
      %s189 = sadd.s32 %s188, 1
      %p192 = scmp.eq.s32.totalorder %s23, 1
      %p193 = scmp.ne.s32.totalorder %s188, %s190
      %p194 = scmp.eq.s32.totalorder %s23, 0
      %p195 = por %p193, %p194
      %p196 = scmp.ne.s32.totalorder %s188, %s190
      %p197 = scmp.eq.s32.totalorder %s28, 1
      %p198 = por %p196, %p197
      %p199 = scmp.ne.s32.totalorder %s190, %s191
      %p200 = scmp.eq.s32.totalorder %s28, 0
      %p201 = por %p199, %p200
      %p202 = scmp.ne.s32.totalorder %s190, %s191
      %p203 = scmp.eq.s32.totalorder %s29, 1
      %p204 = por %p202, %p203
      %p206 = scmp.ne.s32.totalorder %s191, %s205
      %p207 = scmp.eq.s32.totalorder %s29, 0
      %p208 = por %p206, %p207
      %s210 = sadd.s32 %s209, 1
      %p213 = scmp.eq.s32.totalorder %s23, 1
      %p214 = scmp.ne.s32.totalorder %s209, %s211
      %p215 = scmp.eq.s32.totalorder %s23, 0
      %p216 = por %p214, %p215
      %p217 = scmp.ne.s32.totalorder %s209, %s211
      %p218 = scmp.eq.s32.totalorder %s28, 1
      %p219 = por %p217, %p218
      %p220 = scmp.ne.s32.totalorder %s211, %s212
      %p221 = scmp.eq.s32.totalorder %s28, 0
      %p222 = por %p220, %p221
      %p223 = scmp.ne.s32.totalorder %s211, %s212
      %p224 = scmp.eq.s32.totalorder %s29, 1
      %p225 = por %p223, %p224
      %p227 = scmp.ne.s32.totalorder %s212, %s226
      %p228 = scmp.eq.s32.totalorder %s29, 0
      %p229 = por %p227, %p228
      %s231 = sadd.s32 %s230, 1
      %p234 = scmp.eq.s32.totalorder %s23, 1
      %p235 = scmp.ne.s32.totalorder %s230, %s232
      %p236 = scmp.eq.s32.totalorder %s23, 0
      %p237 = por %p235, %p236
      %p238 = scmp.ne.s32.totalorder %s230, %s232
      %p239 = scmp.eq.s32.totalorder %s28, 1
      %p240 = por %p238, %p239
      %p241 = scmp.ne.s32.totalorder %s232, %s233
      %p242 = scmp.eq.s32.totalorder %s28, 0
      %p243 = por %p241, %p242
      %p244 = scmp.ne.s32.totalorder %s232, %s233
      %p245 = scmp.eq.s32.totalorder %s29, 1
      %p246 = por %p244, %p245
      %p248 = scmp.ne.s32.totalorder %s233, %s247
      %p249 = scmp.eq.s32.totalorder %s29, 0
      %p250 = por %p248, %p249
      %s252 = sadd.s32 %s251, 1
      %p255 = scmp.eq.s32.totalorder %s23, 1
      %p256 = scmp.ne.s32.totalorder %s251, %s253
      %p257 = scmp.eq.s32.totalorder %s23, 0
      %p258 = por %p256, %p257
      %p259 = scmp.ne.s32.totalorder %s251, %s253
      %p260 = scmp.eq.s32.totalorder %s28, 1
      %p261 = por %p259, %p260
      %p262 = scmp.ne.s32.totalorder %s253, %s254
      %p263 = scmp.eq.s32.totalorder %s28, 0
      %p264 = por %p262, %p263
      %p265 = scmp.ne.s32.totalorder %s253, %s254
      %p266 = scmp.eq.s32.totalorder %s29, 1
      %p267 = por %p265, %p266
      %p269 = scmp.ne.s32.totalorder %s254, %s268
      %p270 = scmp.eq.s32.totalorder %s29, 0
      %p271 = por %p269, %p270
      %s273 = sadd.s32 %s272, 1
      %p276 = scmp.eq.s32.totalorder %s23, 1
      %p277 = scmp.ne.s32.totalorder %s272, %s274
      %p278 = scmp.eq.s32.totalorder %s23, 0
      %p279 = por %p277, %p278
      %p280 = scmp.ne.s32.totalorder %s272, %s274
      %p281 = scmp.eq.s32.totalorder %s28, 1
      %p282 = por %p280, %p281
      %p283 = scmp.ne.s32.totalorder %s274, %s275
      %p284 = scmp.eq.s32.totalorder %s28, 0
      %p285 = por %p283, %p284
      %p286 = scmp.ne.s32.totalorder %s274, %s275
      %p287 = scmp.eq.s32.totalorder %s29, 1
      %p288 = por %p286, %p287
      %p290 = scmp.ne.s32.totalorder %s275, %s289
      %p291 = scmp.eq.s32.totalorder %s29, 0
      %p292 = por %p290, %p291
      %s294 = sadd.s32 %s293, 1
      %p297 = scmp.eq.s32.totalorder %s23, 1
      %p298 = scmp.ne.s32.totalorder %s293, %s295
      %p299 = scmp.eq.s32.totalorder %s23, 0
      %p300 = por %p298, %p299
      %p301 = scmp.ne.s32.totalorder %s293, %s295
      %p302 = scmp.eq.s32.totalorder %s28, 1
      %p303 = por %p301, %p302
      %p304 = scmp.ne.s32.totalorder %s295, %s296
      %p305 = scmp.eq.s32.totalorder %s28, 0
      %p306 = por %p304, %p305
      %p307 = scmp.ne.s32.totalorder %s295, %s296
      %p308 = scmp.eq.s32.totalorder %s29, 1
      %p309 = por %p307, %p308
      %p311 = scmp.ne.s32.totalorder %s296, %s310
      %p312 = scmp.eq.s32.totalorder %s29, 0
      %p313 = por %p311, %p312
      %s315 = sadd.s32 %s314, 1
      %p318 = scmp.eq.s32.totalorder %s23, 1
      %p319 = scmp.ne.s32.totalorder %s314, %s316
      %p320 = scmp.eq.s32.totalorder %s23, 0
      %p321 = por %p319, %p320
      %p322 = scmp.ne.s32.totalorder %s314, %s316
      %p323 = scmp.eq.s32.totalorder %s28, 1
      %p324 = por %p322, %p323
      %p325 = scmp.ne.s32.totalorder %s316, %s317
      %p326 = scmp.eq.s32.totalorder %s28, 0
      %p327 = por %p325, %p326
      %p328 = scmp.ne.s32.totalorder %s316, %s317
      %p329 = scmp.eq.s32.totalorder %s29, 1
      %p330 = por %p328, %p329
      %p332 = scmp.ne.s32.totalorder %s317, %s331
      %p333 = scmp.eq.s32.totalorder %s29, 0
      %p334 = por %p332, %p333
      %s335 = ssub.s32 %s23, %s30
      %p336 = scmp.eq.s32.totalorder %s335, 0
      %s338 = sadd.s32 %s337, 1
      %s339 = scalar_select %p336, %s337, %s338
      %p342 = pneg %p336
      %p343 = scmp.eq.s32.totalorder %s23, 1
      %p344 = por %p342, %p343
      %p345 = scmp.ne.s32.totalorder %s337, %s340
      %p346 = scmp.eq.s32.totalorder %s23, 0
      %p347 = por %p345, %p346
      %p348 = scmp.ne.s32.totalorder %s337, %s340
      %p349 = scmp.eq.s32.totalorder %s28, 1
      %p350 = por %p348, %p349
      %p351 = scmp.ne.s32.totalorder %s340, %s341
      %p352 = scmp.eq.s32.totalorder %s28, 0
      %p353 = por %p351, %p352
      %p354 = scmp.ne.s32.totalorder %s340, %s341
      %p355 = scmp.eq.s32.totalorder %s29, 1
      %p356 = por %p354, %p355
      %p358 = scmp.ne.s32.totalorder %s341, %s357
      %p359 = scmp.eq.s32.totalorder %s29, 0
      %p360 = por %p358, %p359
      %p361 = scmp.le.s32.totalorder 1, %s23
      %p362 = scmp.lt.s32.totalorder %s23, 3
      %p363 = pnand %p361, %p362
      %p364 = pneg %p363
      // Predicated region
      $region9: #{tpu_custom_call.1} parent=5 // pred_check
        _
      $region10: #{tpu_custom_call.1} parent=5 // pred_check_branch
        %366 = sbr.rel (%p363) target = $region12
      $region11: #{tpu_custom_call.1} parent=5 // pred_region
        %s367 = ssub.s32 %s23, 1
        // Predicated region
        $region13: #{tpu_custom_call.1} parent=11 // pred_check
          %p368 = pneg %p96
        $region14: #{tpu_custom_call.1} parent=11 // pred_check_branch
          %370 = sbr.rel (%p368) target = $region16
        $region15: #{tpu_custom_call.1} parent=11 // pred_region
          _
        $region16: #{tpu_custom_call.1} parent=11 // pred_fallthru
          _
        // Predicated region
        $region17: #{tpu_custom_call.1} parent=11 // pred_check
          %p371 = pneg %p117
        $region18: #{tpu_custom_call.1} parent=11 // pred_check_branch
          %373 = sbr.rel (%p371) target = $region20
        $region19: #{tpu_custom_call.1} parent=11 // pred_region
          _
        $region20: #{tpu_custom_call.1} parent=11 // pred_fallthru
          _
        // Predicated region
        $region21: #{tpu_custom_call.1} parent=11 // pred_check
          %p374 = pneg %p138
        $region22: #{tpu_custom_call.1} parent=11 // pred_check_branch
          %376 = sbr.rel (%p374) target = $region24
        $region23: #{tpu_custom_call.1} parent=11 // pred_region
          _
        $region24: #{tpu_custom_call.1} parent=11 // pred_fallthru
          _
        // Predicated region
        $region25: #{tpu_custom_call.1} parent=11 // pred_check
          %p377 = pneg %p159
        $region26: #{tpu_custom_call.1} parent=11 // pred_check_branch
          %379 = sbr.rel (%p377) target = $region28
        $region27: #{tpu_custom_call.1} parent=11 // pred_region
          _
        $region28: #{tpu_custom_call.1} parent=11 // pred_fallthru
          _
        // Predicated region
        $region29: #{tpu_custom_call.1} parent=11 // pred_check
          %p380 = pneg %p180
        $region30: #{tpu_custom_call.1} parent=11 // pred_check_branch
          %382 = sbr.rel (%p380) target = $region32
        $region31: #{tpu_custom_call.1} parent=11 // pred_region
          _
        $region32: #{tpu_custom_call.1} parent=11 // pred_fallthru
          _
        // Predicated region
        $region33: #{tpu_custom_call.1} parent=11 // pred_check
          %p383 = pneg %p201
        $region34: #{tpu_custom_call.1} parent=11 // pred_check_branch
          %385 = sbr.rel (%p383) target = $region36
        $region35: #{tpu_custom_call.1} parent=11 // pred_region
          _
        $region36: #{tpu_custom_call.1} parent=11 // pred_fallthru
          _
        // Predicated region
        $region37: #{tpu_custom_call.1} parent=11 // pred_check
          %p386 = pneg %p222
        $region38: #{tpu_custom_call.1} parent=11 // pred_check_branch
          %388 = sbr.rel (%p386) target = $region40
        $region39: #{tpu_custom_call.1} parent=11 // pred_region
          _
        $region40: #{tpu_custom_call.1} parent=11 // pred_fallthru
          _
        // Predicated region
        $region41: #{tpu_custom_call.1} parent=11 // pred_check
          %p389 = pneg %p243
        $region42: #{tpu_custom_call.1} parent=11 // pred_check_branch
          %391 = sbr.rel (%p389) target = $region44
        $region43: #{tpu_custom_call.1} parent=11 // pred_region
          _
        $region44: #{tpu_custom_call.1} parent=11 // pred_fallthru
          _
        // Predicated region
        $region45: #{tpu_custom_call.1} parent=11 // pred_check
          %p392 = pneg %p264
        $region46: #{tpu_custom_call.1} parent=11 // pred_check_branch
          %394 = sbr.rel (%p392) target = $region48
        $region47: #{tpu_custom_call.1} parent=11 // pred_region
          _
        $region48: #{tpu_custom_call.1} parent=11 // pred_fallthru
          _
        // Predicated region
        $region49: #{tpu_custom_call.1} parent=11 // pred_check
          %p395 = pneg %p285
        $region50: #{tpu_custom_call.1} parent=11 // pred_check_branch
          %397 = sbr.rel (%p395) target = $region52
        $region51: #{tpu_custom_call.1} parent=11 // pred_region
          _
        $region52: #{tpu_custom_call.1} parent=11 // pred_fallthru
          _
        // Predicated region
        $region53: #{tpu_custom_call.1} parent=11 // pred_check
          %p398 = pneg %p306
        $region54: #{tpu_custom_call.1} parent=11 // pred_check_branch
          %400 = sbr.rel (%p398) target = $region56
        $region55: #{tpu_custom_call.1} parent=11 // pred_region
          _
        $region56: #{tpu_custom_call.1} parent=11 // pred_fallthru
          _
        // Predicated region
        $region57: #{tpu_custom_call.1} parent=11 // pred_check
          %p401 = pneg %p327
        $region58: #{tpu_custom_call.1} parent=11 // pred_check_branch
          %403 = sbr.rel (%p401) target = $region60
        $region59: #{tpu_custom_call.1} parent=11 // pred_region
          _
        $region60: #{tpu_custom_call.1} parent=11 // pred_fallthru
          _
      $region12: #{tpu_custom_call.1} parent=5 // pred_fallthru
        _
      %p404 = scmp.lt.s32.totalorder %s23, 2
      // Predicated region
      $region61: #{tpu_custom_call.1} parent=5 // pred_check
        %p405 = pneg %p404
      $region62: #{tpu_custom_call.1} parent=5 // pred_check_branch
        %407 = sbr.rel (%p405) target = $region64
      $region63: #{tpu_custom_call.1} parent=5 // pred_region
        // Predicated region
        $region65: #{tpu_custom_call.1} parent=63 // pred_check
          %p408 = pneg %p43
        $region66: #{tpu_custom_call.1} parent=63 // pred_check_branch
          %410 = sbr.rel (%p408) target = $region68
        $region67: #{tpu_custom_call.1} parent=63 // pred_region
          %p411 = scmp.lt.s32.totalorder %s23, 1
          %s412 = scalar_select %p411, %s23, 1
          %s413 = smul.addr %s412, 8
          %s414 = scalar_lea.vmem %s0, %s413
        $region68: #{tpu_custom_call.1} parent=63 // pred_fallthru
          _
        // Predicated region
        $region69: #{tpu_custom_call.1} parent=63 // pred_check
          %p415 = pneg %p69
        $region70: #{tpu_custom_call.1} parent=63 // pred_check_branch
          %417 = sbr.rel (%p415) target = $region72
        $region71: #{tpu_custom_call.1} parent=63 // pred_region
          %p418 = scmp.lt.s32.totalorder %s23, 1
          %s419 = scalar_select %p418, %s23, 1
          %s420 = scalar_lea.vmem %s1, %s419
        $region72: #{tpu_custom_call.1} parent=63 // pred_fallthru
          _
      $region64: #{tpu_custom_call.1} parent=5 // pred_fallthru
        _
      %p421 = scmp.le.s32.totalorder 1, %s23
      %p422 = scmp.lt.s32.totalorder %s23, 3
      %p423 = pnand %p421, %p422
      %p424 = pneg %p423
      // Predicated region
      $region73: #{tpu_custom_call.1} parent=5 // pred_check
        _
      $region74: #{tpu_custom_call.1} parent=5 // pred_check_branch
        %426 = sbr.rel (%p423) target = $region76
      $region75: #{tpu_custom_call.1} parent=5 // pred_region
        %s427 = ssub.s32 %s23, 1
        %p428 = scmp.lt.s32.totalorder %s28, 1
        %s429 = scalar_select %p428, %s28, 1
        %s430 = smul.addr %s429, 8
        %s431 = scalar_lea.vmem %s0, %s430
        %p432 = pneg %p49
        %p433 = pneg %p46
        %p434 = scmp.lt.s32.totalorder %s28, 1
        %s435 = scalar_select %p434, %s28, 1
        %s436 = scalar_lea.vmem %s1, %s435
        %p437 = pneg %p75
        %p438 = pneg %p72
        %p439 = pneg %p96
        %p440 = pneg %p93
        %p441 = pneg %p117
        %p442 = pneg %p114
        %p443 = pneg %p138
        %p444 = pneg %p135
        %p445 = pneg %p159
        %p446 = pneg %p156
        %p447 = pneg %p180
        %p448 = pneg %p177
        %p449 = pneg %p201
        %p450 = pneg %p198
        %p451 = pneg %p222
        %p452 = pneg %p219
        %p453 = pneg %p243
        %p454 = pneg %p240
        %p455 = pneg %p264
        %p456 = pneg %p261
        %p457 = pneg %p285
        %p458 = pneg %p282
        %p459 = pneg %p306
        %p460 = pneg %p303
        %p461 = pneg %p327
        %p462 = pneg %p324
        %p463 = pneg %p353
        %p464 = pneg %p350
        %s465 = sand.u32 %s340, 1
        %s466 = scalar_lea.sflag [#allocation3], %s465
        %s467 = sand.u32 %s340, 1
        %s468 = smul.addr %s467, 8
        %s469 = scalar_lea.vmem [#allocation2], %s468
        %p470 = scmp.lt.s32.totalorder %s28, 1
        %s471 = scalar_select %p470, %s28, 1
        %s472 = smul.addr %s471, 8
        %s473 = scalar_lea.vmem %s0, %s472
        %p474 = scmp.lt.s32.totalorder %s28, 1
        %s475 = scalar_select %p474, %s28, 1
        %s476 = scalar_lea.vmem %s1, %s475
        %v478 = vld [vmem:[%s473] sm:$0xff]
        %vm479 = vcmask 261120
        %v480 = vsel %vm479, %v478, 0.0
        %481 = vadd.xlane.f32.xlu0 %v480
        %v482 = vpop.xlane.xlu0 %481
        %v483 = vrcp.pop 32.0
        %v484 = vmul.f32 32.0, %v483
        %v485 = vsub.f32 1.0, %v484
        %v486 = vmul.f32 %v483, %v485
        %v487 = vadd.f32 %v483, %v486
        %vm488 = vweird.f32 %v483
        %v489 = vsel %vm488, %v483, %v487
        %v490 = vmul.f32 %v482, %v489
        %v491 = vsub.f32 %v478, %v490
        %v492 = vmul.f32 %v491, %v491
        %v493 = vsel %vm479, %v492, 0.0
        %494 = vadd.xlane.f32.xlu0 %v493
        %v495 = vpop.xlane.xlu0 %494
        %v496 = vmul.f32 %v495, %v489
        %v497 = vadd.f32 %v496, 1e-05
        %v498 = vrsqrt.pop %v497
        %v499 = vmul.f32 %v498, %v497
        %v500 = vmul.f32 %v499, %v498
        %v501 = vmul.f32 0.5, %v500
        %v502 = vsub.f32 1.5, %v501
        %v503 = vmul.f32 %v498, %v502
        %vm504 = vweird.f32 %v497
        %vm505 = vweird.f32 %v498
        %vm506 = vmor %vm504, %vm505
        %v507 = vsel %vm506, %v498, %v503
        %v508 = vmul.f32 %v491, %v507
        %v509 = vld [vmem:[%s2] sm:$0x1]
        %v511 = vperm.slane %v509, 0
        %v513 = vmul.f32 %v508, %v511
        %v514 = vld [vmem:[%s3] sm:$0x1]
        %v516 = vperm.slane %v514, 0
        %v518 = vadd.f32 %v513, %v516
        %v519 = vpack.c.bf16 %v518, %v518
        %v520 = vld [vmem:[%s4] sm:$0xf]
        %v521 = vld [vmem:[%s4 + $0x4] sm:$0xf]
        %v522 = vld [vmem:[%s4 + $0x8] sm:$0xf]
        %v523 = vld [vmem:[%s4 + $0xc] sm:$0xf]
        %v524 = vld [vmem:[%s5] sm:$0x1]
        %v526 = vperm.slane %v524, 0
        %v532 = vunpack.c.l.b16 %v520
        %v533 = vunpack.c.l.b16 %v521
        %v534 = vunpack.c.l.b16 %v522
        %v535 = vunpack.c.l.b16 %v523
        %v536 = vpack.c.b16 %v533, %v532
        %v537 = vpack.c.b16 %v535, %v534
        %v541 = vsel %vm479, %v519, 0
        %543 = vmatpush.bf16.msra.mxu0 0
        %544 = vmatpush.bf16.msra.mxu0 0
        %545 = vmatpush.bf16.msra.mxu0 0
        %546 = vmatpush.bf16.msra.mxu0 0
        %547 = vmatpush.bf16.msra.mxu0 0
        %548 = vmatpush.bf16.msra.mxu0 0
        %549 = vmatpush.bf16.msra.mxu0 %v537
        %550 = vmatpush.bf16.msra.mxu0 %v536
        %551 = vmatmul.bf16.gmra.mxu0 %v541
        %v552 = vpop.f32.mrf.mxu0
        %v553 = vadd.f32 %v526, %v552
        %v554 = vpop.f32.mrf.mxu0
        %555 = vdwg.mxu0
        %v556 = vld [vmem:[%s476] sm:$0x1]
        %v557 = vlaneseq
        %v558 = vshrl.u32 %v557, 7
        %v559 = vlaneseq
        %v560 = vand.u32 %v559, 127
        %vm561 = vcmp.le.s32.totalorder %v560, %v558
        %vm562 = vcmp.ne.s32.totalorder %v556, 0
        %v563 = vsel %vm562, 1, 0
        %v564 = vperm.slane %v563, 0
        %vm565 = vcmp.eq.s32.totalorder %v564, 1
        %vm566 = vmand %vm561, %vm565
        %v567 = vpack.c.bf16 %v553, %v553
        %569 = vrot.lane.b32.xlu0 %v567, 96
        %v570 = vpop.permute.xlu0 %569
        %vm571 = vcmask 64512
        %v573 = vsel %vm571, %v567, 0
        %v576 = vsel %vm571, %v570, 0
        %578 = vmatpush.bf16.xpose.msra.mxu0 0
        %579 = vmatpush.bf16.xpose.msra.mxu0 0
        %580 = vmatpush.bf16.xpose.msra.mxu0 0
        %581 = vmatpush.bf16.xpose.msra.mxu0 0
        %582 = vmatpush.bf16.xpose.msra.mxu0 0
        %583 = vmatpush.bf16.xpose.msra.mxu0 0
        %584 = vmatpush.bf16.xpose.msra.mxu0 0
        %585 = vmatpush.bf16.xpose.msra.mxu0 %v576
        %586 = vmatmul.bf16.gmra.mxu0 %v573
        %v587 = vpop.f32.mrf.mxu0
        %v588 = vadd.f32 0.0, %v587
        %v589 = vpop.f32.mrf.mxu0
        %590 = vdwg.mxu0
        %v591 = vmul.f32 %v588, 0.35355338
        %v592 = vsel %vm566, %v591, -1e+30
        %v593 = vsel %vm571, %v592, -inf
        %594 = vmax.xlane.f32.xlu0 %v593
        %v595 = vpop.xlane.xlu0 %594
        %v596 = vsub.f32 %v592, %v595
        %v597 = vmul.f32 %v596, 1.442695
        %v598 = vpow.pop %v597
        %v599 = vsel %vm566, %v598, 0.0
        %v600 = vsel %vm571, %v599, 0.0
        %601 = vadd.xlane.f32.xlu0 %v600
        %v602 = vpop.xlane.xlu0 %601
        %v603 = vmax.f32 %v602, 1e-30
        %v604 = vrcp.pop %v603
        %v605 = vmul.f32 %v603, %v604
        %v606 = vsub.f32 1.0, %v605
        %v607 = vmul.f32 %v604, %v606
        %v608 = vadd.f32 %v604, %v607
        %vm609 = vweird.f32 %v603
        %vm610 = vweird.f32 %v604
        %vm611 = vmor %vm609, %vm610
        %v612 = vsel %vm611, %v604, %v608
        %v613 = vand.u32 2147483647, %v603
        %vm614 = vcmp.eq.f32.partialorder %v613, 8.507059e+37
        %v615 = vand.u32 %v603, 2147483648
        %v616 = vor.u32 1.1754944e-38, %v615
        %v617 = vsel %vm614, %v616, %v612
        %v618 = vmul.f32 %v599, %v617
        %v619 = vpack.c.bf16 %v618, %v618
        %620 = vrot.lane.b32.xlu0 %v567, 64
        %v621 = vpop.permute.xlu0 %620
        %v623 = vsel %vm571, %v619, 0
        %vm625 = vcmask 1043456
        %v627 = vsel %vm625, %v621, 0
        %629 = vmatpush.bf16.msra.mxu0 0
        %630 = vmatpush.bf16.msra.mxu0 0
        %631 = vmatpush.bf16.msra.mxu0 0
        %632 = vmatpush.bf16.msra.mxu0 0
        %633 = vmatpush.bf16.msra.mxu0 0
        %634 = vmatpush.bf16.msra.mxu0 0
        %635 = vmatpush.bf16.msra.mxu0 0
        %636 = vmatpush.bf16.msra.mxu0 %v627
        %637 = vmatmul.bf16.gmra.mxu0 %v623
        %v638 = vpop.f32.mrf.mxu0
        %v639 = vadd.f32 0.0, %v638
        %v640 = vpop.f32.mrf.mxu0
        %641 = vdwg.mxu0
        %v642 = vpack.c.bf16 %v639, %v639
        %v643 = vld [vmem:[%s6] sm:$0xf]
        %644 = vrot.lane.b32.xlu0 %v567, 120
        %v645 = vpop.permute.xlu0 %644
        %646 = vrot.lane.b32.xlu0 %v567, 88
        %v647 = vpop.permute.xlu0 %646
        %v649 = vsel %vm571, %v645, 0
        %v652 = vsel %vm571, %v647, 0
        %654 = vmatpush.bf16.xpose.msra.mxu0 0
        %655 = vmatpush.bf16.xpose.msra.mxu0 0
        %656 = vmatpush.bf16.xpose.msra.mxu0 0
        %657 = vmatpush.bf16.xpose.msra.mxu0 0
        %658 = vmatpush.bf16.xpose.msra.mxu0 0
        %659 = vmatpush.bf16.xpose.msra.mxu0 0
        %660 = vmatpush.bf16.xpose.msra.mxu0 0
        %661 = vmatpush.bf16.xpose.msra.mxu0 %v652
        %662 = vmatmul.bf16.gmra.mxu0 %v649
        %v663 = vpop.f32.mrf.mxu0
        %v664 = vadd.f32 0.0, %v663
        %v665 = vpop.f32.mrf.mxu0
        %666 = vdwg.mxu0
        %v667 = vmul.f32 %v664, 0.35355338
        %v668 = vsel %vm566, %v667, -1e+30
        %v669 = vsel %vm571, %v668, -inf
        %670 = vmax.xlane.f32.xlu0 %v669
        %v671 = vpop.xlane.xlu0 %670
        %v672 = vsub.f32 %v668, %v671
        %v673 = vmul.f32 %v672, 1.442695
        %v674 = vpow.pop %v673
        %v675 = vsel %vm566, %v674, 0.0
        %v676 = vsel %vm571, %v675, 0.0
        %677 = vadd.xlane.f32.xlu0 %v676
        %v678 = vpop.xlane.xlu0 %677
        %v679 = vmax.f32 %v678, 1e-30
        %v680 = vrcp.pop %v679
        %v681 = vmul.f32 %v679, %v680
        %v682 = vsub.f32 1.0, %v681
        %v683 = vmul.f32 %v680, %v682
        %v684 = vadd.f32 %v680, %v683
        %vm685 = vweird.f32 %v679
        %vm686 = vweird.f32 %v680
        %vm687 = vmor %vm685, %vm686
        %v688 = vsel %vm687, %v680, %v684
        %v689 = vand.u32 2147483647, %v679
        %vm690 = vcmp.eq.f32.partialorder %v689, 8.507059e+37
        %v691 = vand.u32 %v679, 2147483648
        %v692 = vor.u32 1.1754944e-38, %v691
        %v693 = vsel %vm690, %v692, %v688
        %v694 = vmul.f32 %v675, %v693
        %v695 = vpack.c.bf16 %v694, %v694
        %696 = vrot.lane.b32.xlu0 %v567, 56
        %v697 = vpop.permute.xlu0 %696
        %v699 = vsel %vm571, %v695, 0
        %v702 = vsel %vm625, %v697, 0
        %704 = vmatpush.bf16.msra.mxu0 0
        %705 = vmatpush.bf16.msra.mxu0 0
        %706 = vmatpush.bf16.msra.mxu0 0
        %707 = vmatpush.bf16.msra.mxu0 0
        %708 = vmatpush.bf16.msra.mxu0 0
        %709 = vmatpush.bf16.msra.mxu0 0
        %710 = vmatpush.bf16.msra.mxu0 0
        %711 = vmatpush.bf16.msra.mxu0 %v702
        %712 = vmatmul.bf16.gmra.mxu0 %v699
        %v713 = vpop.f32.mrf.mxu0
        %v714 = vadd.f32 0.0, %v713
        %v715 = vpop.f32.mrf.mxu0
        %716 = vdwg.mxu0
        %v717 = vpack.c.bf16 %v714, %v714
        %v718 = vld [vmem:[%s6 + $0x4] sm:$0xf]
        %v720 = vsel %vm571, %v717, 0
        %v723 = vsel %vm625, %v718, 0
        %725 = vmatpush.bf16.msra.mxu0 0
        %726 = vmatpush.bf16.msra.mxu0 0
        %727 = vmatpush.bf16.msra.mxu0 0
        %728 = vmatpush.bf16.msra.mxu0 0
        %729 = vmatpush.bf16.msra.mxu0 0
        %730 = vmatpush.bf16.msra.mxu0 0
        %731 = vmatpush.bf16.msra.mxu0 0
        %732 = vmatpush.bf16.msra.mxu0 %v723
        %733 = vmatmul.bf16.gmra.mxu0 %v720
        %v734 = vpop.f32.mrf.mxu0
        %v735 = vadd.f32 0.0, %v734
        %v736 = vpop.f32.mrf.mxu0
        %737 = vdwg.mxu0
        %v739 = vsel %vm571, %v642, 0
        %v742 = vsel %vm625, %v643, 0
        %744 = vmatpush.bf16.msra.mxu0 0
        %745 = vmatpush.bf16.msra.mxu0 0
        %746 = vmatpush.bf16.msra.mxu0 0
        %747 = vmatpush.bf16.msra.mxu0 0
        %748 = vmatpush.bf16.msra.mxu0 0
        %749 = vmatpush.bf16.msra.mxu0 0
        %750 = vmatpush.bf16.msra.mxu0 0
        %751 = vmatpush.bf16.msra.mxu0 %v742
        %752 = vmatmul.bf16.gmra.mxu0 %v739
        %v753 = vpop.f32.mrf.mxu0
        %v754 = vadd.f32 %v735, %v753
        %v755 = vpop.f32.mrf.mxu0
        %756 = vdwg.mxu0
        %757 = vrot.lane.b32.xlu0 %v567, 112
        %v758 = vpop.permute.xlu0 %757
        %759 = vrot.lane.b32.xlu0 %v567, 80
        %v760 = vpop.permute.xlu0 %759
        %v762 = vsel %vm571, %v758, 0
        %v765 = vsel %vm571, %v760, 0
        %767 = vmatpush.bf16.xpose.msra.mxu0 0
        %768 = vmatpush.bf16.xpose.msra.mxu0 0
        %769 = vmatpush.bf16.xpose.msra.mxu0 0
        %770 = vmatpush.bf16.xpose.msra.mxu0 0
        %771 = vmatpush.bf16.xpose.msra.mxu0 0
        %772 = vmatpush.bf16.xpose.msra.mxu0 0
        %773 = vmatpush.bf16.xpose.msra.mxu0 0
        %774 = vmatpush.bf16.xpose.msra.mxu0 %v765
        %775 = vmatmul.bf16.gmra.mxu0 %v762
        %v776 = vpop.f32.mrf.mxu0
        %v777 = vadd.f32 0.0, %v776
        %v778 = vpop.f32.mrf.mxu0
        %779 = vdwg.mxu0
        %v780 = vmul.f32 %v777, 0.35355338
        %v781 = vsel %vm566, %v780, -1e+30
        %v782 = vsel %vm571, %v781, -inf
        %783 = vmax.xlane.f32.xlu0 %v782
        %v784 = vpop.xlane.xlu0 %783
        %v785 = vsub.f32 %v781, %v784
        %v786 = vmul.f32 %v785, 1.442695
        %v787 = vpow.pop %v786
        %v788 = vsel %vm566, %v787, 0.0
        %v789 = vsel %vm571, %v788, 0.0
        %790 = vadd.xlane.f32.xlu0 %v789
        %v791 = vpop.xlane.xlu0 %790
        %v792 = vmax.f32 %v791, 1e-30
        %v793 = vrcp.pop %v792
        %v794 = vmul.f32 %v792, %v793
        %v795 = vsub.f32 1.0, %v794
        %v796 = vmul.f32 %v793, %v795
        %v797 = vadd.f32 %v793, %v796
        %vm798 = vweird.f32 %v792
        %vm799 = vweird.f32 %v793
        %vm800 = vmor %vm798, %vm799
        %v801 = vsel %vm800, %v793, %v797
        %v802 = vand.u32 2147483647, %v792
        %vm803 = vcmp.eq.f32.partialorder %v802, 8.507059e+37
        %v804 = vand.u32 %v792, 2147483648
        %v805 = vor.u32 1.1754944e-38, %v804
        %v806 = vsel %vm803, %v805, %v801
        %v807 = vmul.f32 %v788, %v806
        %v808 = vpack.c.bf16 %v807, %v807
        %809 = vrot.lane.b32.xlu0 %v567, 48
        %v810 = vpop.permute.xlu0 %809
        %v812 = vsel %vm571, %v808, 0
        %v815 = vsel %vm625, %v810, 0
        %817 = vmatpush.bf16.msra.mxu0 0
        %818 = vmatpush.bf16.msra.mxu0 0
        %819 = vmatpush.bf16.msra.mxu0 0
        %820 = vmatpush.bf16.msra.mxu0 0
        %821 = vmatpush.bf16.msra.mxu0 0
        %822 = vmatpush.bf16.msra.mxu0 0
        %823 = vmatpush.bf16.msra.mxu0 0
        %824 = vmatpush.bf16.msra.mxu0 %v815
        %825 = vmatmul.bf16.gmra.mxu0 %v812
        %v826 = vpop.f32.mrf.mxu0
        %v827 = vadd.f32 0.0, %v826
        %v828 = vpop.f32.mrf.mxu0
        %829 = vdwg.mxu0
        %v830 = vpack.c.bf16 %v827, %v827
        %v831 = vld [vmem:[%s6 + $0x8] sm:$0xf]
        %v833 = vsel %vm571, %v830, 0
        %v836 = vsel %vm625, %v831, 0
        %838 = vmatpush.bf16.msra.mxu0 0
        %839 = vmatpush.bf16.msra.mxu0 0
        %840 = vmatpush.bf16.msra.mxu0 0
        %841 = vmatpush.bf16.msra.mxu0 0
        %842 = vmatpush.bf16.msra.mxu0 0
        %843 = vmatpush.bf16.msra.mxu0 0
        %844 = vmatpush.bf16.msra.mxu0 0
        %845 = vmatpush.bf16.msra.mxu0 %v836
        %846 = vmatmul.bf16.gmra.mxu0 %v833
        %v847 = vpop.f32.mrf.mxu0
        %v848 = vadd.f32 0.0, %v847
        %v849 = vpop.f32.mrf.mxu0
        %850 = vdwg.mxu0
        %v851 = vadd.f32 %v754, %v848
        %852 = vrot.lane.b32.xlu0 %v567, 104
        %v853 = vpop.permute.xlu0 %852
        %854 = vrot.lane.b32.xlu0 %v567, 72
        %v855 = vpop.permute.xlu0 %854
        %v857 = vsel %vm571, %v853, 0
        %v860 = vsel %vm571, %v855, 0
        %862 = vmatpush.bf16.xpose.msra.mxu0 0
        %863 = vmatpush.bf16.xpose.msra.mxu0 0
        %864 = vmatpush.bf16.xpose.msra.mxu0 0
        %865 = vmatpush.bf16.xpose.msra.mxu0 0
        %866 = vmatpush.bf16.xpose.msra.mxu0 0
        %867 = vmatpush.bf16.xpose.msra.mxu0 0
        %868 = vmatpush.bf16.xpose.msra.mxu0 0
        %869 = vmatpush.bf16.xpose.msra.mxu0 %v860
        %870 = vmatmul.bf16.gmra.mxu0 %v857
        %v871 = vpop.f32.mrf.mxu0
        %v872 = vadd.f32 0.0, %v871
        %v873 = vpop.f32.mrf.mxu0
        %874 = vdwg.mxu0
        %v875 = vmul.f32 %v872, 0.35355338
        %v876 = vsel %vm566, %v875, -1e+30
        %v877 = vsel %vm571, %v876, -inf
        %878 = vmax.xlane.f32.xlu0 %v877
        %v879 = vpop.xlane.xlu0 %878
        %v880 = vsub.f32 %v876, %v879
        %v881 = vmul.f32 %v880, 1.442695
        %v882 = vpow.pop %v881
        %v883 = vsel %vm566, %v882, 0.0
        %v884 = vsel %vm571, %v883, 0.0
        %885 = vadd.xlane.f32.xlu0 %v884
        %v886 = vpop.xlane.xlu0 %885
        %v887 = vmax.f32 %v886, 1e-30
        %v888 = vrcp.pop %v887
        %v889 = vmul.f32 %v887, %v888
        %v890 = vsub.f32 1.0, %v889
        %v891 = vmul.f32 %v888, %v890
        %v892 = vadd.f32 %v888, %v891
        %vm893 = vweird.f32 %v887
        %vm894 = vweird.f32 %v888
        %vm895 = vmor %vm893, %vm894
        %v896 = vsel %vm895, %v888, %v892
        %v897 = vand.u32 2147483647, %v887
        %vm898 = vcmp.eq.f32.partialorder %v897, 8.507059e+37
        %v899 = vand.u32 %v887, 2147483648
        %v900 = vor.u32 1.1754944e-38, %v899
        %v901 = vsel %vm898, %v900, %v896
        %v902 = vmul.f32 %v883, %v901
        %v903 = vpack.c.bf16 %v902, %v902
        %904 = vrot.lane.b32.xlu0 %v567, 40
        %v905 = vpop.permute.xlu0 %904
        %v907 = vsel %vm571, %v903, 0
        %v910 = vsel %vm625, %v905, 0
        %912 = vmatpush.bf16.msra.mxu0 0
        %913 = vmatpush.bf16.msra.mxu0 0
        %914 = vmatpush.bf16.msra.mxu0 0
        %915 = vmatpush.bf16.msra.mxu0 0
        %916 = vmatpush.bf16.msra.mxu0 0
        %917 = vmatpush.bf16.msra.mxu0 0
        %918 = vmatpush.bf16.msra.mxu0 0
        %919 = vmatpush.bf16.msra.mxu0 %v910
        %920 = vmatmul.bf16.gmra.mxu0 %v907
        %v921 = vpop.f32.mrf.mxu0
        %v922 = vadd.f32 0.0, %v921
        %v923 = vpop.f32.mrf.mxu0
        %924 = vdwg.mxu0
        %v925 = vpack.c.bf16 %v922, %v922
        %v926 = vld [vmem:[%s6 + $0xc] sm:$0xf]
        %v928 = vsel %vm571, %v925, 0
        %v931 = vsel %vm625, %v926, 0
        %933 = vmatpush.bf16.msra.mxu0 0
        %934 = vmatpush.bf16.msra.mxu0 0
        %935 = vmatpush.bf16.msra.mxu0 0
        %936 = vmatpush.bf16.msra.mxu0 0
        %937 = vmatpush.bf16.msra.mxu0 0
        %938 = vmatpush.bf16.msra.mxu0 0
        %939 = vmatpush.bf16.msra.mxu0 0
        %940 = vmatpush.bf16.msra.mxu0 %v931
        %941 = vmatmul.bf16.gmra.mxu0 %v928
        %v942 = vpop.f32.mrf.mxu0
        %v943 = vadd.f32 0.0, %v942
        %v944 = vpop.f32.mrf.mxu0
        %945 = vdwg.mxu0
        %v946 = vadd.f32 %v851, %v943
        %v947 = vadd.f32 %v478, %v946
        %v948 = vld [vmem:[%s7] sm:$0x1]
        %v950 = vperm.slane %v948, 0
        %v952 = vadd.f32 %v947, %v950
        %v953 = vsel %vm479, %v952, 0.0
        %954 = vadd.xlane.f32.xlu0 %v953
        %v955 = vpop.xlane.xlu0 %954
        %v956 = vmul.f32 %v955, %v489
        %v957 = vsub.f32 %v952, %v956
        %v958 = vmul.f32 %v957, %v957
        %v959 = vsel %vm479, %v958, 0.0
        %960 = vadd.xlane.f32.xlu0 %v959
        %v961 = vpop.xlane.xlu0 %960
        %v962 = vmul.f32 %v961, %v489
        %v963 = vadd.f32 %v962, 1e-05
        %v964 = vrsqrt.pop %v963
        %v965 = vmul.f32 %v964, %v963
        %v966 = vmul.f32 %v965, %v964
        %v967 = vmul.f32 0.5, %v966
        %v968 = vsub.f32 1.5, %v967
        %v969 = vmul.f32 %v964, %v968
        %vm970 = vweird.f32 %v963
        %vm971 = vweird.f32 %v964
        %vm972 = vmor %vm970, %vm971
        %v973 = vsel %vm972, %v964, %v969
        %v974 = vmul.f32 %v957, %v973
        %v975 = vld [vmem:[%s8] sm:$0x1]
        %v977 = vperm.slane %v975, 0
        %v979 = vmul.f32 %v974, %v977
        %v980 = vld [vmem:[%s9] sm:$0x1]
        %v982 = vperm.slane %v980, 0
        %v984 = vadd.f32 %v979, %v982
        %v985 = vpack.c.bf16 %v984, %v984
        %v986 = vld [vmem:[%s10] sm:$0xf]
        %v987 = vld [vmem:[%s10 + $0x4] sm:$0xf]
        %v988 = vld [vmem:[%s10 + $0x8] sm:$0xf]
        %v989 = vld [vmem:[%s10 + $0xc] sm:$0xf]
        %v990 = vld [vmem:[%s11] sm:$0x1]
        %v992 = vperm.slane %v990, 0
        %v998 = vunpack.c.l.b16 %v986
        %v999 = vunpack.c.l.b16 %v987
        %v1000 = vunpack.c.l.b16 %v988
        %v1001 = vunpack.c.l.b16 %v989
        %v1002 = vpack.c.b16 %v999, %v998
        %v1003 = vpack.c.b16 %v1001, %v1000
        %v1007 = vsel %vm479, %v985, 0
        %1009 = vmatpush.bf16.msra.mxu0 0
        %1010 = vmatpush.bf16.msra.mxu0 0
        %1011 = vmatpush.bf16.msra.mxu0 0
        %1012 = vmatpush.bf16.msra.mxu0 0
        %1013 = vmatpush.bf16.msra.mxu0 0
        %1014 = vmatpush.bf16.msra.mxu0 0
        %1015 = vmatpush.bf16.msra.mxu0 %v1003
        %1016 = vmatpush.bf16.msra.mxu0 %v1002
        %1017 = vmatmul.bf16.gmra.mxu0 %v1007
        %v1018 = vpop.f32.mrf.mxu0
        %v1019 = vadd.f32 %v992, %v1018
        %v1020 = vpop.f32.mrf.mxu0
        %1021 = vdwg.mxu0
        %v1022 = vmul.f32 %v1019, 0.5
        %v1023 = vmul.f32 %v1019, 0.044715
        %v1024 = vmul.f32 %v1023, %v1019
        %v1025 = vmul.f32 %v1024, %v1019
        %v1026 = vadd.f32 %v1019, %v1025
        %v1027 = vmul.f32 %v1026, 0.7978846
        %v1028 = vtanh.pop %v1027
        %v1029 = vadd.f32 %v1028, 1.0
        %v1030 = vmul.f32 %v1022, %v1029
        %v1031 = vpack.c.bf16 %v1030, %v1030
        %v1032 = vld [vmem:[%s12] sm:$0xf]
        %v1033 = vld [vmem:[%s12 + $0x4] sm:$0xf]
        %v1034 = vld [vmem:[%s12 + $0x8] sm:$0xf]
        %v1035 = vld [vmem:[%s12 + $0xc] sm:$0xf]
        %v1036 = vld [vmem:[%s12 + $0x10] sm:$0xf]
        %v1037 = vld [vmem:[%s12 + $0x14] sm:$0xf]
        %v1038 = vld [vmem:[%s12 + $0x18] sm:$0xf]
        %v1039 = vld [vmem:[%s12 + $0x1c] sm:$0xf]
        %v1040 = vld [vmem:[%s12 + $0x20] sm:$0xf]
        %v1041 = vld [vmem:[%s12 + $0x24] sm:$0xf]
        %v1042 = vld [vmem:[%s12 + $0x28] sm:$0xf]
        %v1043 = vld [vmem:[%s12 + $0x2c] sm:$0xf]
        %v1044 = vld [vmem:[%s12 + $0x30] sm:$0xf]
        %v1045 = vld [vmem:[%s12 + $0x34] sm:$0xf]
        %v1046 = vld [vmem:[%s12 + $0x38] sm:$0xf]
        %v1047 = vld [vmem:[%s12 + $0x3c] sm:$0xf]
        %v1048 = vld [vmem:[%s13] sm:$0x1]
        %v1050 = vperm.slane %v1048, 0
        %v1068 = vunpack.c.l.b16 %v1032
        %v1069 = vunpack.c.l.b16 %v1033
        %v1070 = vunpack.c.l.b16 %v1034
        %v1071 = vunpack.c.l.b16 %v1035
        %v1072 = vunpack.c.l.b16 %v1036
        %v1073 = vunpack.c.l.b16 %v1037
        %v1074 = vunpack.c.l.b16 %v1038
        %v1075 = vunpack.c.l.b16 %v1039
        %v1076 = vunpack.c.l.b16 %v1040
        %v1077 = vunpack.c.l.b16 %v1041
        %v1078 = vunpack.c.l.b16 %v1042
        %v1079 = vunpack.c.l.b16 %v1043
        %v1080 = vunpack.c.l.b16 %v1044
        %v1081 = vunpack.c.l.b16 %v1045
        %v1082 = vunpack.c.l.b16 %v1046
        %v1083 = vunpack.c.l.b16 %v1047
        %v1084 = vpack.c.b16 %v1069, %v1068
        %v1085 = vpack.c.b16 %v1071, %v1070
        %v1086 = vpack.c.b16 %v1073, %v1072
        %v1087 = vpack.c.b16 %v1075, %v1074
        %v1088 = vpack.c.b16 %v1077, %v1076
        %v1089 = vpack.c.b16 %v1079, %v1078
        %v1090 = vpack.c.b16 %v1081, %v1080
        %v1091 = vpack.c.b16 %v1083, %v1082
        %1100 = vmatpush.bf16.msra.mxu0 %v1091
        %1101 = vmatpush.bf16.msra.mxu0 %v1090
        %1102 = vmatpush.bf16.msra.mxu0 %v1089
        %1103 = vmatpush.bf16.msra.mxu0 %v1088
        %1104 = vmatpush.bf16.msra.mxu0 %v1087
        %1105 = vmatpush.bf16.msra.mxu0 %v1086
        %1106 = vmatpush.bf16.msra.mxu0 %v1085
        %1107 = vmatpush.bf16.msra.mxu0 %v1084
        %1108 = vmatmul.bf16.gmra.mxu0 %v1031
        %v1109 = vpop.f32.mrf.mxu0
        %v1110 = vadd.f32 %v1050, %v1109
        %v1111 = vpop.f32.mrf.mxu0
        %1112 = vdwg.mxu0
        %v1113 = vadd.f32 %v952, %v1110
        %1114 = vst.msk [vmem:[%s469] sm:$0xff] %vm479, %v1113
        %s1115 = sand.u32 %s340, 1
        %s1116 = scalar_lea.sflag [#allocation3], %s1115
        %s1117 = sand.u32 %s340, 1
        %s1118 = smul.addr %s1117, 8
        %s1119 = scalar_lea.vmem [#allocation2], %s1118
        // Predicated region
        $region77: #{tpu_custom_call.1} parent=75 // pred_check
          %p1120 = pneg %p350
        $region78: #{tpu_custom_call.1} parent=75 // pred_check_branch
          %1122 = sbr.rel (%p1120) target = $region80
        $region79: #{tpu_custom_call.1} parent=75 // pred_region
          %1124 = vsyncadd %s1116, 0
          %s1125 = smul.addr %s28, 8
          %s1126 = scalar_lea.hbm %s14, %s1125
          %s1128 = sshll.u32 %s1119, 4
          %s1129 = int_to_ptr.vmem [resolvable:$true] %s1128
          %s1130 = sshll.u32 %s1126, 4
          %s1131 = int_to_ptr.hbm [resolvable:$true] %s1130
          %1133 = dma.vmem_to_hbm [thread:$0]  %s1129, 128, %s1131, %s1116
        $region80: #{tpu_custom_call.1} parent=75 // pred_fallthru
          _
      $region76: #{tpu_custom_call.1} parent=5 // pred_fallthru
        _
      %p1134 = scmp.le.s32.totalorder 2, %s23
      // Predicated region
      $region81: #{tpu_custom_call.1} parent=5 // pred_check
        %p1135 = pneg %p1134
      $region82: #{tpu_custom_call.1} parent=5 // pred_check_branch
        %1137 = sbr.rel (%p1135) target = $region84
      $region83: #{tpu_custom_call.1} parent=5 // pred_region
        %s1138 = ssub.s32 %s23, 2
        // Predicated region
        $region85: #{tpu_custom_call.1} parent=83 // pred_check
          %p1139 = pneg %p356
        $region86: #{tpu_custom_call.1} parent=83 // pred_check_branch
          %1141 = sbr.rel (%p1139) target = $region88
        $region87: #{tpu_custom_call.1} parent=83 // pred_region
          %s1142 = sand.u32 %s341, 1
          %s1143 = scalar_lea.sflag [#allocation3], %s1142
          %s1144 = sand.u32 %s341, 1
          %s1145 = smul.addr %s1144, 8
          %s1146 = scalar_lea.vmem [#allocation2], %s1145
          %1148 = dma.done %s1143, 128
        $region88: #{tpu_custom_call.1} parent=83 // pred_fallthru
          _
      $region84: #{tpu_custom_call.1} parent=5 // pred_fallthru
        _
    $region6: #{tpu_custom_call.1} parent=1 // loop_footer
      %s27 = sadd.s32 1, %s23
    $region7: #{tpu_custom_call.1} parent=1 // loop_footer_branch
      %22 = sbr.rel target = $region3
    $region8: #{tpu_custom_call.1} parent=1 // loop_exit
      _
    %1149 = vsyncpa [#allocation3], 1
    %s1150 = scalar_lea.sflag [#allocation3], 1
    %1151 = vsyncpa %s1150, 1

</llo_original>
